<compile_context>
chip_gen: v5e
topology: v5e:2x2
jax: 0.10.0
libtpu: 0.0.40
codegen_flags: <defaults>
</compile_context>

<pallas_src>
import jax
import jax.numpy as jnp
from jax.experimental import pallas as pl
from jax.experimental.pallas import tpu as pltpu


_ROW_TILE = 1024              # rows per grid step (amortizes ~0.35 us/step overhead)
_NAA = 20                     # amino-acid alphabet; energies_output_dim = 20*20 = 400
_VMEM_LIMIT = 48 * 1024 * 1024  # <= physical VMEM on v5e/v6e/v7x


def _row_tile(m):
    """Row tile: full extent when small (always a legal block), else 1024
    (multiple of 16 -> legal sublane granularity for both f32 and bf16)."""
    return _ROW_TILE if m >= _ROW_TILE else m


# ----------------------------- Pallas kernels ------------------------------ #

def _proj_kernel(h_ref, wt_ref, b_ref, code_ref, eye_ref, out_ref):
    """etab = (h @ W^T + b) * scale.

    Per-row scale code:
        code == 0 -> 0                 (residue i is padding: x_mask == 0)
        code == 1 -> 1                 (ordinary edge)
        code == 2 -> eye20_flat[col]   (self edge, k == 0)
    """
    code = code_ref[...]                                    # (TM, 1)  f32
    scale = jnp.where(code > 1.5, eye_ref[...], code)       # (TM, D)  f32
    y = jnp.dot(h_ref[...], wt_ref[...],
                preferred_element_type=jnp.float32)         # MXU, f32 acc
    out_ref[...] = (y + b_ref[...]) * scale


def _merge_kernel(e_ref, rev_ref, out_ref):
    """merge_duplicate_pairE: average with the (already 20x20-transposed,
    already existence-masked) reverse-edge entries where they are nonzero —
    identical to the reference's elementwise `rev == 0` test."""
    e = e_ref[...]
    r = rev_ref[...].astype(jnp.float32)
    out_ref[...] = jnp.where(r != 0.0, 0.5 * (e + r), e)


# --------------------------- pallas_call wrappers --------------------------- #

def _pallas_project(h_bf16, w_t, bias, code, eye_flat):
    m, kdim = h_bf16.shape
    d = w_t.shape[1]
    tm = _row_tile(m)
    row_spec = lambda i: (i, 0)
    rep_spec = lambda i: (0, 0)
    return pl.pallas_call(
        _proj_kernel,
        out_shape=jax.ShapeDtypeStruct((m, d), jnp.float32),
        grid=(pl.cdiv(m, tm),),
        in_specs=[
            pl.BlockSpec((tm, kdim), row_spec),    # h rows (bf16)
            pl.BlockSpec((kdim, d), rep_spec),     # W^T          (resident)
            pl.BlockSpec((1, d), rep_spec),        # bias
            pl.BlockSpec((tm, 1), row_spec),       # packed mask/self code
            pl.BlockSpec((1, d), rep_spec),        # flattened eye(20)
        ],
        out_specs=pl.BlockSpec((tm, d), row_spec),
        compiler_params=pltpu.CompilerParams(
            dimension_semantics=("parallel",),
            vmem_limit_bytes=_VMEM_LIMIT),
    )(h_bf16, w_t, bias, code, eye_flat)


def _pallas_merge(e_flat, rev_flat_bf16):
    m, d = e_flat.shape
    tm = _row_tile(m)
    row_spec = lambda i: (i, 0)
    return pl.pallas_call(
        _merge_kernel,
        out_shape=jax.ShapeDtypeStruct((m, d), jnp.float32),
        grid=(pl.cdiv(m, tm),),
        in_specs=[pl.BlockSpec((tm, d), row_spec),
                  pl.BlockSpec((tm, d), row_spec)],
        out_specs=pl.BlockSpec((tm, d), row_spec),
        input_output_aliases={0: 0},      # merge in place over the etab buffer
        compiler_params=pltpu.CompilerParams(
            dimension_semantics=("parallel",),
            vmem_limit_bytes=_VMEM_LIMIT),
    )(e_flat, rev_flat_bf16)


# ------------------------------- JAX glue ----------------------------------- #

def _knn_edge_idx(X, x_mask, k, eps=1e-6):
    """ProteinFeatures._dist: masked C-alpha pairwise distances + kNN."""
    # TODO(synk): torch.topk (kNN selection) has no clean Pallas equivalent;
    # this O(N^2) index construction stays in plain JAX (not the hot path).
    x_ca = X[:, :, 1, :]
    mask2d = x_mask[:, None, :] * x_mask[:, :, None]
    dX = x_ca[:, None, :, :] - x_ca[:, :, None, :]
    D = mask2d * jnp.sqrt(jnp.sum(dX * dX, axis=-1) + eps)
    D_max = jnp.max(D, axis=-1, keepdims=True)
    D_adjust = D + (1.0 - mask2d) * D_max
    _, e_idx = jax.lax.top_k(-D_adjust, k)
    return e_idx.astype(jnp.int32)


def ablated_pair_energies_forward(params, V_embed, E_embed, X, x_mask, chain_idx,
                                  k_neighbors):
    # chain_idx only affects chain-positional features inside
    # MultiChainProteinFeatures, not E_idx, so it is unused on this path.
    del chain_idx
    B, N, H = V_embed.shape
    K = k_neighbors
    Dout = params["W"].shape[0]
    assert Dout == _NAA * _NAA, "energies_output_dim must be 20*20"
    M = B * N * K

    E_idx = _knn_edge_idx(X, x_mask, K)                                   # (B,N,K)

    # --- gather_edges / gather_nodes / cat_edge_endpoints (glue, in bf16) --- #
    V16 = V_embed.astype(jnp.bfloat16)
    E16 = E_embed.astype(jnp.bfloat16)
    b_ix = jnp.arange(B)[:, None, None]
    E_nb = jnp.take_along_axis(E16, E_idx[..., None], axis=2)             # (B,N,K,H)
    h_j = V16[b_ix, E_idx]                                                # (B,N,K,H)
    h_i = V16[b_ix, jnp.broadcast_to(E_idx[:, :, :1], (B, N, K))]         # (B,N,K,H)
    h_flat = jnp.concatenate([h_i, h_j, E_nb], axis=-1).reshape(M, 3 * H)

    # --- per-row scale code + constant tables ------------------------------- #
    mask_f = x_mask.astype(jnp.float32)
    is_self = (jnp.arange(K) == 0).astype(jnp.float32)[None, None, :]     # k == 0
    code = (jnp.broadcast_to(mask_f[:, :, None], (B, N, K)) * (1.0 + is_self))
    code = code.reshape(M, 1)

    cidx = jnp.arange(Dout)
    eye_flat = ((cidx // _NAA) == (cidx % _NAA)).astype(jnp.float32)
    eye_flat = eye_flat.reshape(1, Dout)

    w_t = params["W"].T.astype(jnp.bfloat16)                              # (3H, D)
    bias = params["b"].astype(jnp.float32).reshape(1, Dout)

    # --- Pallas kernel 1: Linear + residue/self masks (single table) -------- #
    etab_flat = _pallas_project(h_flat, w_t, bias, code, eye_flat)

    # --- reverse-edge lookup for merge_duplicate_pairE (index glue) --------- #
    # TODO(synk): the data-dependent reverse-edge row gather stays in XLA; a
    # per-row manual DMA gather inside the merge kernel is not worth the
    # complexity at ~1 KB per row.
    etab4 = etab_flat.reshape(B, N, K, Dout)
    j = E_idx
    E_idx_of_j = E_idx[b_ix, j]                                           # (B,N,K,K)
    i_arr = jnp.arange(N)[None, :, None, None]
    match = E_idx_of_j == i_arr
    rev_exists = jnp.any(match, axis=-1)                                  # (B,N,K)
    # last-write-wins on duplicate neighbors, matching the reference scatter
    k_rev = (K - 1) - jnp.argmax(match[..., ::-1], axis=-1)
    k_rev = k_rev.astype(jnp.int32)                                       # (B,N,K)
    rev = etab4[b_ix, j, k_rev]                                           # (B,N,K,D)
    # 20x20 transpose applied only to the gathered rows (fuses into the gather)
    rev = rev.reshape(B, N, K, _NAA, _NAA)
    rev = jnp.swapaxes(rev, -1, -2).reshape(B, N, K, Dout)
    rev = jnp.where(rev_exists[..., None], rev, 0.0).astype(jnp.bfloat16)

    # --- Pallas kernel 2: elementwise merge of duplicate pair energies ------ #
    merged_flat = _pallas_merge(etab_flat, rev.reshape(M, Dout))
    return merged_flat.reshape(B, N, K, Dout), E_idx


# -------------------- pure-JAX reference (for validation) ------------------- #

def _reference_tail(params, V_embed, E_embed, x_mask, E_idx):
    """Faithful f32 re-implementation of the PyTorch tail (given E_idx)."""
    B, N, H = V_embed.shape
    K = E_idx.shape[-1]
    b_ix = jnp.arange(B)[:, None, None]
    E_nb = jnp.take_along_axis(E_embed, E_idx[..., None], axis=2)
    h_j = V_embed[b_ix, E_idx]
    h_i = V_embed[b_ix, jnp.broadcast_to(E_idx[:, :, :1], (B, N, K))]
    h_E = jnp.concatenate([h_i, h_j, E_nb], axis=-1)
    etab = jnp.einsum("bnkc,dc->bnkd", h_E, params["W"]) + params["b"]
    etab = etab * x_mask[:, :, None, None]
    etab = etab.reshape(B, N, K, _NAA, _NAA)
    etab = etab.at[:, :, 0].multiply(jnp.eye(_NAA))
    # merge_duplicate_pairE (scatter into NxN, transpose, gather, average)
    coll = jnp.zeros((B, N, N, _NAA, _NAA), jnp.float32)
    i_arr = jnp.arange(N)[None, :, None]
    coll = coll.at[b_ix, i_arr, E_idx].set(etab)
    coll = jnp.swapaxes(coll, 1, 2)
    coll = jnp.swapaxes(coll, -1, -2)
    rev = coll[b_ix, i_arr, E_idx]
    merged = jnp.where(rev == 0.0, etab, 0.5 * (etab + rev))
    return merged.reshape(B, N, K, _NAA * _NAA)


# --------------------------------- demo ------------------------------------- #

if __name__ == "__main__":
    # hparams: energies_hidden_dim = energies_input_dim = 32, k_neighbors = 8,
    #          energies_output_dim = 400 (20 x 20), energies_augment_eps = 0.
    B, N, K, H = 2, 16, 8, 32
    Dout = 400

    key = jax.random.PRNGKey(0)
    k1, k2, k3, k4, k5 = jax.random.split(key, 5)
    V_embed = jax.random.normal(k1, (B, N, H), dtype=jnp.float32)
    E_embed = jax.random.normal(k2, (B, N, N, H), dtype=jnp.float32)
    X = jax.random.normal(k3, (B, N, 4, 3), dtype=jnp.float32) * 3.0
    x_mask = jnp.ones((B, N), dtype=jnp.float32).at[1, N - 1].set(0.0)
    chain_idx = jnp.zeros((B, N), dtype=jnp.int32)

    # deterministic synthetic parameters for W = nn.Linear(3*H, 400)
    params = {
        "W": jax.random.normal(k4, (Dout, 3 * H), dtype=jnp.float32) * 0.02,
        "b": jax.random.normal(k5, (Dout,), dtype=jnp.float32) * 0.01,
    }

    fwd = jax.jit(ablated_pair_energies_forward, static_argnames=("k_neighbors",))
    etab, E_idx = fwd(params, V_embed, E_embed, X, x_mask, chain_idx,
                      k_neighbors=K)
    jax.block_until_ready((etab, E_idx))

    assert etab.shape == (B, N, K, Dout)
    assert E_idx.shape == (B, N, K)

    # Loose-tolerance check against an f32 reference (Pallas path uses bf16
    # MXU operands with f32 accumulation + bf16 reverse rows).
    etab_ref = _reference_tail(params, V_embed, E_embed, x_mask, E_idx)
    max_err = float(jnp.max(jnp.abs(etab - etab_ref)))
    assert max_err < 2e-2, f"max abs error vs reference: {max_err}"

    print("KERNEL_OK")
</pallas_src>

<mosaic_0001>
module attributes {stable_mosaic.version = 11 : i64} {
  func.func @_proj_kernel(%arg0: i32, %arg1: memref<256x96xbf16, #tpu.memory_space<vmem>>, %arg2: memref<96x400xbf16, #tpu.memory_space<vmem>>, %arg3: memref<1x400xf32, #tpu.memory_space<vmem>>, %arg4: memref<256x1xf32, #tpu.memory_space<vmem>>, %arg5: memref<1x400xf32, #tpu.memory_space<vmem>>, %arg6: memref<256x400xf32, #tpu.memory_space<vmem>>) attributes {dimension_semantics = [#tpu.dimension_semantics<parallel>], iteration_bounds = array<i64: 1>, scalar_prefetch = 0 : i64, scratch_operands = 0 : i64, tpu.core_type = #tpu.core_type<tc>, window_params = [{transform_indices = @transform_0, window_bounds = array<i64: 256, 96>}, {pipeline_mode = #tpu.pipeline_mode<synchronous>, transform_indices = @transform_1, window_bounds = array<i64: 96, 400>}, {pipeline_mode = #tpu.pipeline_mode<synchronous>, transform_indices = @transform_2, window_bounds = array<i64: 1, 400>}, {transform_indices = @transform_3, window_bounds = array<i64: 256, 1>}, {pipeline_mode = #tpu.pipeline_mode<synchronous>, transform_indices = @transform_4, window_bounds = array<i64: 1, 400>}, {transform_indices = @transform_5, window_bounds = array<i64: 256, 400>}]} {
    %c0 = arith.constant 0 : index
    %c0_0 = arith.constant 0 : index
    %0 = vector.load %arg4[%c0, %c0_0] : memref<256x1xf32, #tpu.memory_space<vmem>>, vector<256x1xf32>
    %cst = arith.constant 1.500000e+00 : f32
    %1 = vector.broadcast %cst : f32 to vector<256x1xf32>
    %2 = arith.cmpf ogt, %0, %1 : vector<256x1xf32>
    %c0_1 = arith.constant 0 : index
    %c0_2 = arith.constant 0 : index
    %3 = vector.load %arg5[%c0_1, %c0_2] : memref<1x400xf32, #tpu.memory_space<vmem>>, vector<1x400xf32>
    %4 = vector.shape_cast %2 : vector<256x1xi1> to vector<256x1xi1>
    %5 = vector.broadcast %4 : vector<256x1xi1> to vector<256x400xi1>
    %6 = vector.shape_cast %3 : vector<1x400xf32> to vector<1x400xf32>
    %7 = vector.broadcast %6 : vector<1x400xf32> to vector<256x400xf32>
    %8 = vector.shape_cast %0 : vector<256x1xf32> to vector<256x1xf32>
    %9 = vector.broadcast %8 : vector<256x1xf32> to vector<256x400xf32>
    %10 = arith.select %5, %7, %9 : vector<256x400xi1>, vector<256x400xf32>
    %c0_3 = arith.constant 0 : index
    %c0_4 = arith.constant 0 : index
    %11 = vector.load %arg1[%c0_3, %c0_4] : memref<256x96xbf16, #tpu.memory_space<vmem>>, vector<256x96xbf16>
    %c0_5 = arith.constant 0 : index
    %c0_6 = arith.constant 0 : index
    %12 = vector.load %arg2[%c0_5, %c0_6] : memref<96x400xbf16, #tpu.memory_space<vmem>>, vector<96x400xbf16>
    %cst_7 = arith.constant dense<0.000000e+00> : vector<256x400xf32>
    %13 = tpu.matmul %11, %12, %cst_7 {dimension_numbers = #tpu.dot_dimension_numbers<[1], [0], [0], [1], [0, 0, 1, 1], [], []>} : vector<256x96xbf16>, vector<96x400xbf16>, vector<256x400xf32> -> vector<256x400xf32>
    %c0_8 = arith.constant 0 : index
    %c0_9 = arith.constant 0 : index
    %14 = vector.load %arg3[%c0_8, %c0_9] : memref<1x400xf32, #tpu.memory_space<vmem>>, vector<1x400xf32>
    %15 = vector.broadcast %14 : vector<1x400xf32> to vector<256x400xf32>
    %16 = arith.addf %13, %15 : vector<256x400xf32>
    %17 = arith.mulf %16, %10 : vector<256x400xf32>
    %c0_10 = arith.constant 0 : index
    %c0_11 = arith.constant 0 : index
    %18 = vector.load %arg6[%c0_10, %c0_11] : memref<256x400xf32, #tpu.memory_space<vmem>>, vector<256x400xf32>
    tpu.vector_store %arg6[%c0_10, %c0_11], %17 {strides = array<i32>} : memref<256x400xf32, #tpu.memory_space<vmem>>, vector<256x400xf32>,
    return
  }
  func.func @transform_0(%arg0: i32) -> (i32, i32) {
    %c0_i32 = arith.constant 0 : i32
    %c0_i32_0 = arith.constant 0 : i32
    return %arg0, %c0_i32 : i32, i32
  }
  func.func @transform_1(%arg0: i32) -> (i32, i32) {
    %c0_i32 = arith.constant 0 : i32
    %c0_i32_0 = arith.constant 0 : i32
    %c0_i32_1 = arith.constant 0 : i32
    return %c0_i32, %c0_i32_0 : i32, i32
  }
  func.func @transform_2(%arg0: i32) -> (i32, i32) {
    %c0_i32 = arith.constant 0 : i32
    %c0_i32_0 = arith.constant 0 : i32
    %c0_i32_1 = arith.constant 0 : i32
    return %c0_i32, %c0_i32_0 : i32, i32
  }
  func.func @transform_3(%arg0: i32) -> (i32, i32) {
    %c0_i32 = arith.constant 0 : i32
    %c0_i32_0 = arith.constant 0 : i32
    return %arg0, %c0_i32 : i32, i32
  }
  func.func @transform_4(%arg0: i32) -> (i32, i32) {
    %c0_i32 = arith.constant 0 : i32
    %c0_i32_0 = arith.constant 0 : i32
    %c0_i32_1 = arith.constant 0 : i32
    return %c0_i32, %c0_i32_0 : i32, i32
  }
  func.func @transform_5(%arg0: i32) -> (i32, i32) {
    %c0_i32 = arith.constant 0 : i32
    %c0_i32_0 = arith.constant 0 : i32
    return %arg0, %c0_i32 : i32, i32
  }
}

module attributes {stable_mosaic.version = 11 : i64} {
  func.func @_merge_kernel(%arg0: i32, %arg1: memref<256x400xf32, #tpu.memory_space<vmem>>, %arg2: memref<256x400xbf16, #tpu.memory_space<vmem>>, %arg3: memref<256x400xf32, #tpu.memory_space<vmem>>) attributes {dimension_semantics = [#tpu.dimension_semantics<parallel>], iteration_bounds = array<i64: 1>, scalar_prefetch = 0 : i64, scratch_operands = 0 : i64, tpu.core_type = #tpu.core_type<tc>, window_params = [{transform_indices = @transform_0, window_bounds = array<i64: 256, 400>}, {transform_indices = @transform_1, window_bounds = array<i64: 256, 400>}, {transform_indices = @transform_2, window_bounds = array<i64: 256, 400>}]} {
    %c0 = arith.constant 0 : index
    %c0_0 = arith.constant 0 : index
    %0 = vector.load %arg1[%c0, %c0_0] : memref<256x400xf32, #tpu.memory_space<vmem>>, vector<256x400xf32>
    %c0_1 = arith.constant 0 : index
    %c0_2 = arith.constant 0 : index
    %1 = vector.load %arg2[%c0_1, %c0_2] : memref<256x400xbf16, #tpu.memory_space<vmem>>, vector<256x400xbf16>
    %2 = arith.extf %1 : vector<256x400xbf16> to vector<256x400xf32>
    %cst = arith.constant 0.000000e+00 : f32
    %3 = vector.broadcast %cst : f32 to vector<256x400xf32>
    %4 = arith.cmpf one, %2, %3 : vector<256x400xf32>
    %5 = arith.addf %0, %2 : vector<256x400xf32>
    %cst_3 = arith.constant 5.000000e-01 : f32
    %6 = vector.broadcast %cst_3 : f32 to vector<256x400xf32>
    %7 = arith.mulf %6, %5 : vector<256x400xf32>
    %8 = arith.select %4, %7, %0 : vector<256x400xi1>, vector<256x400xf32>
    %c0_4 = arith.constant 0 : index
    %c0_5 = arith.constant 0 : index
    %9 = vector.load %arg3[%c0_4, %c0_5] : memref<256x400xf32, #tpu.memory_space<vmem>>, vector<256x400xf32>
    tpu.vector_store %arg3[%c0_4, %c0_5], %8 {strides = array<i32>} : memref<256x400xf32, #tpu.memory_space<vmem>>, vector<256x400xf32>,
    return
  }
  func.func @transform_0(%arg0: i32) -> (i32, i32) {
    %c0_i32 = arith.constant 0 : i32
    %c0_i32_0 = arith.constant 0 : i32
    return %arg0, %c0_i32 : i32, i32
  }
  func.func @transform_1(%arg0: i32) -> (i32, i32) {
    %c0_i32 = arith.constant 0 : i32
    %c0_i32_0 = arith.constant 0 : i32
    return %arg0, %c0_i32 : i32, i32
  }
  func.func @transform_2(%arg0: i32) -> (i32, i32) {
    %c0_i32 = arith.constant 0 : i32
    %c0_i32_0 = arith.constant 0 : i32
    return %arg0, %c0_i32 : i32, i32
  }
}

</mosaic_0001>

<llo_original>
// kernel: ablated_pair_energies_forward.2
$region0: #{ablated_pair_energies_forward.2}
  #allocation0 [shape = 'u32[]', space=smem, size = 0x4, offset = 0x4, fixed_abs, tag = 'smem constant byte address 0x4 - core index']
  #allocation1 [shape = 'u32[72,128]{1,0:T(1,128)}', space=vmem, size = 0x9000, scoped, tag = 'internal scratch']
  %s0 = inlined_call_operand.vmem [shape: bf16[256,96], index: 0, kind: input, shape index: {}]
  %s1 = inlined_call_operand.vmem [shape: bf16[96,400], index: 1, kind: input, shape index: {}]
  %s2 = inlined_call_operand.vmem [shape: f32[1,400], index: 2, kind: input, shape index: {}]
  %s3 = inlined_call_operand.vmem [shape: f32[256,1], index: 3, kind: input, shape index: {}]
  %s4 = inlined_call_operand.vmem [shape: f32[1,400], index: 4, kind: input, shape index: {}]
  %s5 = inlined_call_operand.vmem [shape: f32[256,400], index: 5, kind: output, shape index: {}]
  %s6 = sld [smem:[#allocation0]]
  $region30: #{ablated_pair_energies_forward.2} parent=0
    _
  %s8 = ssub.s32 1, %s6
  %s9 = scalar_select 0, %s8, %s6
  // Predicated region
  $region2: #{ablated_pair_energies_forward.2} parent=0 // pred_check
    _
  $region3: #{ablated_pair_energies_forward.2} parent=0 // pred_check_branch
    %11 = sbr.rel (0) target = $region5
  $region4: #{ablated_pair_energies_forward.2} parent=0 // pred_region
    _
  $region5: #{ablated_pair_energies_forward.2} parent=0 // pred_fallthru
    _
  // Predicated region
  $region6: #{ablated_pair_energies_forward.2} parent=0 // pred_check
    _
  $region7: #{ablated_pair_energies_forward.2} parent=0 // pred_check_branch
    %13 = sbr.rel (0) target = $region9
  $region8: #{ablated_pair_energies_forward.2} parent=0 // pred_region
    _
  $region9: #{ablated_pair_energies_forward.2} parent=0 // pred_fallthru
    _
  // Predicated region
  $region10: #{ablated_pair_energies_forward.2} parent=0 // pred_check
    _
  $region11: #{ablated_pair_energies_forward.2} parent=0 // pred_check_branch
    %15 = sbr.rel (0) target = $region13
  $region12: #{ablated_pair_energies_forward.2} parent=0 // pred_region
    _
  $region13: #{ablated_pair_energies_forward.2} parent=0 // pred_fallthru
    _
  // Predicated region
  $region14: #{ablated_pair_energies_forward.2} parent=0 // pred_check
    _
  $region15: #{ablated_pair_energies_forward.2} parent=0 // pred_check_branch
    %17 = sbr.rel (0) target = $region17
  $region16: #{ablated_pair_energies_forward.2} parent=0 // pred_region
    _
  $region17: #{ablated_pair_energies_forward.2} parent=0 // pred_fallthru
    _
  // Predicated region
  $region18: #{ablated_pair_energies_forward.2} parent=0 // pred_check
    _
  $region19: #{ablated_pair_energies_forward.2} parent=0 // pred_check_branch
    %19 = sbr.rel (0) target = $region21
  $region20: #{ablated_pair_energies_forward.2} parent=0 // pred_region
    _
  $region21: #{ablated_pair_energies_forward.2} parent=0 // pred_fallthru
    _
  %v21 = vld [vmem:[%s3] sm:$0xff]
  %v22 = vld [vmem:[%s3 + $0x8] sm:$0xff]
  %v23 = vld [vmem:[%s3 + $0x10] sm:$0xff]
  %v24 = vld [vmem:[%s3 + $0x18] sm:$0xff]
  %v25 = vld [vmem:[%s3 + $0x20] sm:$0xff]
  %v26 = vld [vmem:[%s3 + $0x28] sm:$0xff]
  %v27 = vld [vmem:[%s3 + $0x30] sm:$0xff]
  %v28 = vld [vmem:[%s3 + $0x38] sm:$0xff]
  %v29 = vld [vmem:[%s3 + $0x40] sm:$0xff]
  %v30 = vld [vmem:[%s3 + $0x48] sm:$0xff]
  %v31 = vld [vmem:[%s3 + $0x50] sm:$0xff]
  %v32 = vld [vmem:[%s3 + $0x58] sm:$0xff]
  %v33 = vld [vmem:[%s3 + $0x60] sm:$0xff]
  %v34 = vld [vmem:[%s3 + $0x68] sm:$0xff]
  %v35 = vld [vmem:[%s3 + $0x70] sm:$0xff]
  %v36 = vld [vmem:[%s3 + $0x78] sm:$0xff]
  %v37 = vld [vmem:[%s3 + $0x80] sm:$0xff]
  %v38 = vld [vmem:[%s3 + $0x88] sm:$0xff]
  %v39 = vld [vmem:[%s3 + $0x90] sm:$0xff]
  %v40 = vld [vmem:[%s3 + $0x98] sm:$0xff]
  %v41 = vld [vmem:[%s3 + $0xa0] sm:$0xff]
  %v42 = vld [vmem:[%s3 + $0xa8] sm:$0xff]
  %v43 = vld [vmem:[%s3 + $0xb0] sm:$0xff]
  %v44 = vld [vmem:[%s3 + $0xb8] sm:$0xff]
  %v45 = vld [vmem:[%s3 + $0xc0] sm:$0xff]
  %v46 = vld [vmem:[%s3 + $0xc8] sm:$0xff]
  %v47 = vld [vmem:[%s3 + $0xd0] sm:$0xff]
  %v48 = vld [vmem:[%s3 + $0xd8] sm:$0xff]
  %v49 = vld [vmem:[%s3 + $0xe0] sm:$0xff]
  %v50 = vld [vmem:[%s3 + $0xe8] sm:$0xff]
  %v51 = vld [vmem:[%s3 + $0xf0] sm:$0xff]
  %v52 = vld [vmem:[%s3 + $0xf8] sm:$0xff]
  %vm53 = vcmp.gt.f32.partialorder %v21, 1.5
  %vm54 = vcmp.gt.f32.partialorder %v22, 1.5
  %vm55 = vcmp.gt.f32.partialorder %v23, 1.5
  %vm56 = vcmp.gt.f32.partialorder %v24, 1.5
  %vm57 = vcmp.gt.f32.partialorder %v25, 1.5
  %vm58 = vcmp.gt.f32.partialorder %v26, 1.5
  %vm59 = vcmp.gt.f32.partialorder %v27, 1.5
  %vm60 = vcmp.gt.f32.partialorder %v28, 1.5
  %vm61 = vcmp.gt.f32.partialorder %v29, 1.5
  %vm62 = vcmp.gt.f32.partialorder %v30, 1.5
  %vm63 = vcmp.gt.f32.partialorder %v31, 1.5
  %vm64 = vcmp.gt.f32.partialorder %v32, 1.5
  %vm65 = vcmp.gt.f32.partialorder %v33, 1.5
  %vm66 = vcmp.gt.f32.partialorder %v34, 1.5
  %vm67 = vcmp.gt.f32.partialorder %v35, 1.5
  %vm68 = vcmp.gt.f32.partialorder %v36, 1.5
  %vm69 = vcmp.gt.f32.partialorder %v37, 1.5
  %vm70 = vcmp.gt.f32.partialorder %v38, 1.5
  %vm71 = vcmp.gt.f32.partialorder %v39, 1.5
  %vm72 = vcmp.gt.f32.partialorder %v40, 1.5
  %vm73 = vcmp.gt.f32.partialorder %v41, 1.5
  %vm74 = vcmp.gt.f32.partialorder %v42, 1.5
  %vm75 = vcmp.gt.f32.partialorder %v43, 1.5
  %vm76 = vcmp.gt.f32.partialorder %v44, 1.5
  %vm77 = vcmp.gt.f32.partialorder %v45, 1.5
  %vm78 = vcmp.gt.f32.partialorder %v46, 1.5
  %vm79 = vcmp.gt.f32.partialorder %v47, 1.5
  %vm80 = vcmp.gt.f32.partialorder %v48, 1.5
  %vm81 = vcmp.gt.f32.partialorder %v49, 1.5
  %vm82 = vcmp.gt.f32.partialorder %v50, 1.5
  %vm83 = vcmp.gt.f32.partialorder %v51, 1.5
  %vm84 = vcmp.gt.f32.partialorder %v52, 1.5
  %v85 = vld [vmem:[%s4] sm:$0xf]
  %v86 = vsel %vm53, 1, 0
  %v87 = vsel %vm54, 1, 0
  %v88 = vsel %vm55, 1, 0
  %v89 = vsel %vm56, 1, 0
  %v90 = vsel %vm57, 1, 0
  %v91 = vsel %vm58, 1, 0
  %v92 = vsel %vm59, 1, 0
  %v93 = vsel %vm60, 1, 0
  %v94 = vsel %vm61, 1, 0
  %v95 = vsel %vm62, 1, 0
  %v96 = vsel %vm63, 1, 0
  %v97 = vsel %vm64, 1, 0
  %v98 = vsel %vm65, 1, 0
  %v99 = vsel %vm66, 1, 0
  %v100 = vsel %vm67, 1, 0
  %v101 = vsel %vm68, 1, 0
  %v102 = vsel %vm69, 1, 0
  %v103 = vsel %vm70, 1, 0
  %v104 = vsel %vm71, 1, 0
  %v105 = vsel %vm72, 1, 0
  %v106 = vsel %vm73, 1, 0
  %v107 = vsel %vm74, 1, 0
  %v108 = vsel %vm75, 1, 0
  %v109 = vsel %vm76, 1, 0
  %v110 = vsel %vm77, 1, 0
  %v111 = vsel %vm78, 1, 0
  %v112 = vsel %vm79, 1, 0
  %v113 = vsel %vm80, 1, 0
  %v114 = vsel %vm81, 1, 0
  %v115 = vsel %vm82, 1, 0
  %v116 = vsel %vm83, 1, 0
  %v117 = vsel %vm84, 1, 0
  %118 = vset.pattern.permute.xlu0 0
  %119 = vperm.xlu0 %118, %v86
  %v120 = vpop.permute.xlu0 %119
  %121 = vset.pattern.permute.xlu0 0
  %122 = vperm.xlu0 %121, %v87
  %v123 = vpop.permute.xlu0 %122
  %124 = vset.pattern.permute.xlu0 0
  %125 = vperm.xlu0 %124, %v88
  %v126 = vpop.permute.xlu0 %125
  %127 = vset.pattern.permute.xlu0 0
  %128 = vperm.xlu0 %127, %v89
  %v129 = vpop.permute.xlu0 %128
  %130 = vset.pattern.permute.xlu0 0
  %131 = vperm.xlu0 %130, %v90
  %v132 = vpop.permute.xlu0 %131
  %133 = vset.pattern.permute.xlu0 0
  %134 = vperm.xlu0 %133, %v91
  %v135 = vpop.permute.xlu0 %134
  %136 = vset.pattern.permute.xlu0 0
  %137 = vperm.xlu0 %136, %v92
  %v138 = vpop.permute.xlu0 %137
  %139 = vset.pattern.permute.xlu0 0
  %140 = vperm.xlu0 %139, %v93
  %v141 = vpop.permute.xlu0 %140
  %142 = vset.pattern.permute.xlu0 0
  %143 = vperm.xlu0 %142, %v94
  %v144 = vpop.permute.xlu0 %143
  %145 = vset.pattern.permute.xlu0 0
  %146 = vperm.xlu0 %145, %v95
  %v147 = vpop.permute.xlu0 %146
  %148 = vset.pattern.permute.xlu0 0
  %149 = vperm.xlu0 %148, %v96
  %v150 = vpop.permute.xlu0 %149
  %151 = vset.pattern.permute.xlu0 0
  %152 = vperm.xlu0 %151, %v97
  %v153 = vpop.permute.xlu0 %152
  %154 = vset.pattern.permute.xlu0 0
  %155 = vperm.xlu0 %154, %v98
  %v156 = vpop.permute.xlu0 %155
  %157 = vset.pattern.permute.xlu0 0
  %158 = vperm.xlu0 %157, %v99
  %v159 = vpop.permute.xlu0 %158
  %160 = vset.pattern.permute.xlu0 0
  %161 = vperm.xlu0 %160, %v100
  %v162 = vpop.permute.xlu0 %161
  %163 = vset.pattern.permute.xlu0 0
  %164 = vperm.xlu0 %163, %v101
  %v165 = vpop.permute.xlu0 %164
  %166 = vset.pattern.permute.xlu0 0
  %167 = vperm.xlu0 %166, %v102
  %v168 = vpop.permute.xlu0 %167
  %169 = vset.pattern.permute.xlu0 0
  %170 = vperm.xlu0 %169, %v103
  %v171 = vpop.permute.xlu0 %170
  %172 = vset.pattern.permute.xlu0 0
  %173 = vperm.xlu0 %172, %v104
  %v174 = vpop.permute.xlu0 %173
  %175 = vset.pattern.permute.xlu0 0
  %176 = vperm.xlu0 %175, %v105
  %v177 = vpop.permute.xlu0 %176
  %178 = vset.pattern.permute.xlu0 0
  %179 = vperm.xlu0 %178, %v106
  %v180 = vpop.permute.xlu0 %179
  %181 = vset.pattern.permute.xlu0 0
  %182 = vperm.xlu0 %181, %v107
  %v183 = vpop.permute.xlu0 %182
  %184 = vset.pattern.permute.xlu0 0
  %185 = vperm.xlu0 %184, %v108
  %v186 = vpop.permute.xlu0 %185
  %187 = vset.pattern.permute.xlu0 0
  %188 = vperm.xlu0 %187, %v109
  %v189 = vpop.permute.xlu0 %188
  %190 = vset.pattern.permute.xlu0 0
  %191 = vperm.xlu0 %190, %v110
  %v192 = vpop.permute.xlu0 %191
  %193 = vset.pattern.permute.xlu0 0
  %194 = vperm.xlu0 %193, %v111
  %v195 = vpop.permute.xlu0 %194
  %196 = vset.pattern.permute.xlu0 0
  %197 = vperm.xlu0 %196, %v112
  %v198 = vpop.permute.xlu0 %197
  %199 = vset.pattern.permute.xlu0 0
  %200 = vperm.xlu0 %199, %v113
  %v201 = vpop.permute.xlu0 %200
  %202 = vset.pattern.permute.xlu0 0
  %203 = vperm.xlu0 %202, %v114
  %v204 = vpop.permute.xlu0 %203
  %205 = vset.pattern.permute.xlu0 0
  %206 = vperm.xlu0 %205, %v115
  %v207 = vpop.permute.xlu0 %206
  %208 = vset.pattern.permute.xlu0 0
  %209 = vperm.xlu0 %208, %v116
  %v210 = vpop.permute.xlu0 %209
  %211 = vset.pattern.permute.xlu0 0
  %212 = vperm.xlu0 %211, %v117
  %v213 = vpop.permute.xlu0 %212
  %vm214 = vcmp.eq.s32.totalorder %v120, 1
  %vm215 = vcmp.eq.s32.totalorder %v123, 1
  %vm216 = vcmp.eq.s32.totalorder %v126, 1
  %vm217 = vcmp.eq.s32.totalorder %v129, 1
  %vm218 = vcmp.eq.s32.totalorder %v132, 1
  %vm219 = vcmp.eq.s32.totalorder %v135, 1
  %vm220 = vcmp.eq.s32.totalorder %v138, 1
  %vm221 = vcmp.eq.s32.totalorder %v141, 1
  %vm222 = vcmp.eq.s32.totalorder %v144, 1
  %vm223 = vcmp.eq.s32.totalorder %v147, 1
  %vm224 = vcmp.eq.s32.totalorder %v150, 1
  %vm225 = vcmp.eq.s32.totalorder %v153, 1
  %vm226 = vcmp.eq.s32.totalorder %v156, 1
  %vm227 = vcmp.eq.s32.totalorder %v159, 1
  %vm228 = vcmp.eq.s32.totalorder %v162, 1
  %vm229 = vcmp.eq.s32.totalorder %v165, 1
  %vm230 = vcmp.eq.s32.totalorder %v168, 1
  %vm231 = vcmp.eq.s32.totalorder %v171, 1
  %vm232 = vcmp.eq.s32.totalorder %v174, 1
  %vm233 = vcmp.eq.s32.totalorder %v177, 1
  %vm234 = vcmp.eq.s32.totalorder %v180, 1
  %vm235 = vcmp.eq.s32.totalorder %v183, 1
  %vm236 = vcmp.eq.s32.totalorder %v186, 1
  %vm237 = vcmp.eq.s32.totalorder %v189, 1
  %vm238 = vcmp.eq.s32.totalorder %v192, 1
  %vm239 = vcmp.eq.s32.totalorder %v195, 1
  %vm240 = vcmp.eq.s32.totalorder %v198, 1
  %vm241 = vcmp.eq.s32.totalorder %v201, 1
  %vm242 = vcmp.eq.s32.totalorder %v204, 1
  %vm243 = vcmp.eq.s32.totalorder %v207, 1
  %vm244 = vcmp.eq.s32.totalorder %v210, 1
  %vm245 = vcmp.eq.s32.totalorder %v213, 1
  %v247 = vperm.slane %v85, 0
  %v248 = vperm.slane %v85, 1
  %v249 = vperm.slane %v85, 2
  %v250 = vperm.slane %v85, 3
  %256 = vset.pattern.permute.xlu0 0
  %257 = vperm.xlu0 %256, %v21
  %v258 = vpop.permute.xlu0 %257
  %261 = vset.pattern.permute.xlu0 0
  %262 = vperm.xlu0 %261, %v22
  %v263 = vpop.permute.xlu0 %262
  %266 = vset.pattern.permute.xlu0 0
  %267 = vperm.xlu0 %266, %v23
  %v268 = vpop.permute.xlu0 %267
  %271 = vset.pattern.permute.xlu0 0
  %272 = vperm.xlu0 %271, %v24
  %v273 = vpop.permute.xlu0 %272
  %276 = vset.pattern.permute.xlu0 0
  %277 = vperm.xlu0 %276, %v25
  %v278 = vpop.permute.xlu0 %277
  %281 = vset.pattern.permute.xlu0 0
  %282 = vperm.xlu0 %281, %v26
  %v283 = vpop.permute.xlu0 %282
  %286 = vset.pattern.permute.xlu0 0
  %287 = vperm.xlu0 %286, %v27
  %v288 = vpop.permute.xlu0 %287
  %291 = vset.pattern.permute.xlu0 0
  %292 = vperm.xlu0 %291, %v28
  %v293 = vpop.permute.xlu0 %292
  %296 = vset.pattern.permute.xlu0 0
  %297 = vperm.xlu0 %296, %v29
  %v298 = vpop.permute.xlu0 %297
  %301 = vset.pattern.permute.xlu0 0
  %302 = vperm.xlu0 %301, %v30
  %v303 = vpop.permute.xlu0 %302
  %306 = vset.pattern.permute.xlu0 0
  %307 = vperm.xlu0 %306, %v31
  %v308 = vpop.permute.xlu0 %307
  %311 = vset.pattern.permute.xlu0 0
  %312 = vperm.xlu0 %311, %v32
  %v313 = vpop.permute.xlu0 %312
  %316 = vset.pattern.permute.xlu0 0
  %317 = vperm.xlu0 %316, %v33
  %v318 = vpop.permute.xlu0 %317
  %321 = vset.pattern.permute.xlu0 0
  %322 = vperm.xlu0 %321, %v34
  %v323 = vpop.permute.xlu0 %322
  %326 = vset.pattern.permute.xlu0 0
  %327 = vperm.xlu0 %326, %v35
  %v328 = vpop.permute.xlu0 %327
  %331 = vset.pattern.permute.xlu0 0
  %332 = vperm.xlu0 %331, %v36
  %v333 = vpop.permute.xlu0 %332
  %336 = vset.pattern.permute.xlu0 0
  %337 = vperm.xlu0 %336, %v37
  %v338 = vpop.permute.xlu0 %337
  %341 = vset.pattern.permute.xlu0 0
  %342 = vperm.xlu0 %341, %v38
  %v343 = vpop.permute.xlu0 %342
  %346 = vset.pattern.permute.xlu0 0
  %347 = vperm.xlu0 %346, %v39
  %v348 = vpop.permute.xlu0 %347
  %351 = vset.pattern.permute.xlu0 0
  %352 = vperm.xlu0 %351, %v40
  %v353 = vpop.permute.xlu0 %352
  %356 = vset.pattern.permute.xlu0 0
  %357 = vperm.xlu0 %356, %v41
  %v358 = vpop.permute.xlu0 %357
  %361 = vset.pattern.permute.xlu0 0
  %362 = vperm.xlu0 %361, %v42
  %v363 = vpop.permute.xlu0 %362
  %366 = vset.pattern.permute.xlu0 0
  %367 = vperm.xlu0 %366, %v43
  %v368 = vpop.permute.xlu0 %367
  %371 = vset.pattern.permute.xlu0 0
  %372 = vperm.xlu0 %371, %v44
  %v373 = vpop.permute.xlu0 %372
  %376 = vset.pattern.permute.xlu0 0
  %377 = vperm.xlu0 %376, %v45
  %v378 = vpop.permute.xlu0 %377
  %381 = vset.pattern.permute.xlu0 0
  %382 = vperm.xlu0 %381, %v46
  %v383 = vpop.permute.xlu0 %382
  %386 = vset.pattern.permute.xlu0 0
  %387 = vperm.xlu0 %386, %v47
  %v388 = vpop.permute.xlu0 %387
  %391 = vset.pattern.permute.xlu0 0
  %392 = vperm.xlu0 %391, %v48
  %v393 = vpop.permute.xlu0 %392
  %396 = vset.pattern.permute.xlu0 0
  %397 = vperm.xlu0 %396, %v49
  %v398 = vpop.permute.xlu0 %397
  %401 = vset.pattern.permute.xlu0 0
  %402 = vperm.xlu0 %401, %v50
  %v403 = vpop.permute.xlu0 %402
  %406 = vset.pattern.permute.xlu0 0
  %407 = vperm.xlu0 %406, %v51
  %v408 = vpop.permute.xlu0 %407
  %411 = vset.pattern.permute.xlu0 0
  %412 = vperm.xlu0 %411, %v52
  %v413 = vpop.permute.xlu0 %412
  %v415 = vsel %vm214, %v247, %v258
  %v416 = vsel %vm214, %v248, %v258
  %v417 = vsel %vm214, %v249, %v258
  %v418 = vsel %vm214, %v250, %v258
  %v419 = vsel %vm215, %v247, %v263
  %v420 = vsel %vm215, %v248, %v263
  %v421 = vsel %vm215, %v249, %v263
  %v422 = vsel %vm215, %v250, %v263
  %v423 = vsel %vm216, %v247, %v268
  %v424 = vsel %vm216, %v248, %v268
  %v425 = vsel %vm216, %v249, %v268
  %v426 = vsel %vm216, %v250, %v268
  %v427 = vsel %vm217, %v247, %v273
  %v428 = vsel %vm217, %v248, %v273
  %v429 = vsel %vm217, %v249, %v273
  %v430 = vsel %vm217, %v250, %v273
  %v431 = vsel %vm218, %v247, %v278
  %v432 = vsel %vm218, %v248, %v278
  %v433 = vsel %vm218, %v249, %v278
  %v434 = vsel %vm218, %v250, %v278
  %v435 = vsel %vm219, %v247, %v283
  %v436 = vsel %vm219, %v248, %v283
  %v437 = vsel %vm219, %v249, %v283
  %v438 = vsel %vm219, %v250, %v283
  %v439 = vsel %vm220, %v247, %v288
  %v440 = vsel %vm220, %v248, %v288
  %v441 = vsel %vm220, %v249, %v288
  %v442 = vsel %vm220, %v250, %v288
  %v443 = vsel %vm221, %v247, %v293
  %v444 = vsel %vm221, %v248, %v293
  %v445 = vsel %vm221, %v249, %v293
  %v446 = vsel %vm221, %v250, %v293
  %v447 = vsel %vm222, %v247, %v298
  %v448 = vsel %vm222, %v248, %v298
  %v449 = vsel %vm222, %v249, %v298
  %v450 = vsel %vm222, %v250, %v298
  %v451 = vsel %vm223, %v247, %v303
  %v452 = vsel %vm223, %v248, %v303
  %v453 = vsel %vm223, %v249, %v303
  %v454 = vsel %vm223, %v250, %v303
  %v455 = vsel %vm224, %v247, %v308
  %v456 = vsel %vm224, %v248, %v308
  %v457 = vsel %vm224, %v249, %v308
  %v458 = vsel %vm224, %v250, %v308
  %v459 = vsel %vm225, %v247, %v313
  %v460 = vsel %vm225, %v248, %v313
  %v461 = vsel %vm225, %v249, %v313
  %v462 = vsel %vm225, %v250, %v313
  %v463 = vsel %vm226, %v247, %v318
  %v464 = vsel %vm226, %v248, %v318
  %v465 = vsel %vm226, %v249, %v318
  %v466 = vsel %vm226, %v250, %v318
  %v467 = vsel %vm227, %v247, %v323
  %v468 = vsel %vm227, %v248, %v323
  %v469 = vsel %vm227, %v249, %v323
  %v470 = vsel %vm227, %v250, %v323
  %v471 = vsel %vm228, %v247, %v328
  %v472 = vsel %vm228, %v248, %v328
  %v473 = vsel %vm228, %v249, %v328
  %v474 = vsel %vm228, %v250, %v328
  %v475 = vsel %vm229, %v247, %v333
  %v476 = vsel %vm229, %v248, %v333
  %v477 = vsel %vm229, %v249, %v333
  %v478 = vsel %vm229, %v250, %v333
  %v479 = vsel %vm230, %v247, %v338
  %v480 = vsel %vm230, %v248, %v338
  %v481 = vsel %vm230, %v249, %v338
  %v482 = vsel %vm230, %v250, %v338
  %v483 = vsel %vm231, %v247, %v343
  %v484 = vsel %vm231, %v248, %v343
  %v485 = vsel %vm231, %v249, %v343
  %v486 = vsel %vm231, %v250, %v343
  %v487 = vsel %vm232, %v247, %v348
  %v488 = vsel %vm232, %v248, %v348
  %v489 = vsel %vm232, %v249, %v348
  %v490 = vsel %vm232, %v250, %v348
  %v491 = vsel %vm233, %v247, %v353
  %v492 = vsel %vm233, %v248, %v353
  %v493 = vsel %vm233, %v249, %v353
  %v494 = vsel %vm233, %v250, %v353
  %v495 = vsel %vm234, %v247, %v358
  %v496 = vsel %vm234, %v248, %v358
  %v497 = vsel %vm234, %v249, %v358
  %v498 = vsel %vm234, %v250, %v358
  %v499 = vsel %vm235, %v247, %v363
  %v500 = vsel %vm235, %v248, %v363
  %v501 = vsel %vm235, %v249, %v363
  %v502 = vsel %vm235, %v250, %v363
  %v503 = vsel %vm236, %v247, %v368
  %v504 = vsel %vm236, %v248, %v368
  %v505 = vsel %vm236, %v249, %v368
  %v506 = vsel %vm236, %v250, %v368
  %v507 = vsel %vm237, %v247, %v373
  %v508 = vsel %vm237, %v248, %v373
  %v509 = vsel %vm237, %v249, %v373
  %v510 = vsel %vm237, %v250, %v373
  %v511 = vsel %vm238, %v247, %v378
  %v512 = vsel %vm238, %v248, %v378
  %v513 = vsel %vm238, %v249, %v378
  %v514 = vsel %vm238, %v250, %v378
  %v515 = vsel %vm239, %v247, %v383
  %v516 = vsel %vm239, %v248, %v383
  %v517 = vsel %vm239, %v249, %v383
  %v518 = vsel %vm239, %v250, %v383
  %v519 = vsel %vm240, %v247, %v388
  %v520 = vsel %vm240, %v248, %v388
  %v521 = vsel %vm240, %v249, %v388
  %v522 = vsel %vm240, %v250, %v388
  %v523 = vsel %vm241, %v247, %v393
  %v524 = vsel %vm241, %v248, %v393
  %v525 = vsel %vm241, %v249, %v393
  %v526 = vsel %vm241, %v250, %v393
  %v527 = vsel %vm242, %v247, %v398
  %v528 = vsel %vm242, %v248, %v398
  %v529 = vsel %vm242, %v249, %v398
  %v530 = vsel %vm242, %v250, %v398
  %v531 = vsel %vm243, %v247, %v403
  %v532 = vsel %vm243, %v248, %v403
  %v533 = vsel %vm243, %v249, %v403
  %v534 = vsel %vm243, %v250, %v403
  %v535 = vsel %vm244, %v247, %v408
  %v536 = vsel %vm244, %v248, %v408
  %v537 = vsel %vm244, %v249, %v408
  %v538 = vsel %vm244, %v250, %v408
  %v539 = vsel %vm245, %v247, %v413
  %v540 = vsel %vm245, %v248, %v413
  %v541 = vsel %vm245, %v249, %v413
  %v542 = vsel %vm245, %v250, %v413
  %v543 = vld [vmem:[%s0] sm:$0xf]
  %v544 = vld [vmem:[%s0 + $0x4] sm:$0xf]
  %v545 = vld [vmem:[%s0 + $0x8] sm:$0xf]
  %v546 = vld [vmem:[%s0 + $0xc] sm:$0xf]
  %v547 = vld [vmem:[%s0 + $0x10] sm:$0xf]
  %v548 = vld [vmem:[%s0 + $0x14] sm:$0xf]
  %v549 = vld [vmem:[%s0 + $0x18] sm:$0xf]
  %v550 = vld [vmem:[%s0 + $0x1c] sm:$0xf]
  %v551 = vld [vmem:[%s0 + $0x20] sm:$0xf]
  %v552 = vld [vmem:[%s0 + $0x24] sm:$0xf]
  %v553 = vld [vmem:[%s0 + $0x28] sm:$0xf]
  %v554 = vld [vmem:[%s0 + $0x2c] sm:$0xf]
  %v555 = vld [vmem:[%s0 + $0x30] sm:$0xf]
  %v556 = vld [vmem:[%s0 + $0x34] sm:$0xf]
  %v557 = vld [vmem:[%s0 + $0x38] sm:$0xf]
  %v558 = vld [vmem:[%s0 + $0x3c] sm:$0xf]
  %v559 = vld [vmem:[%s0 + $0x40] sm:$0xf]
  %v560 = vld [vmem:[%s0 + $0x44] sm:$0xf]
  %v561 = vld [vmem:[%s0 + $0x48] sm:$0xf]
  %v562 = vld [vmem:[%s0 + $0x4c] sm:$0xf]
  %v563 = vld [vmem:[%s0 + $0x50] sm:$0xf]
  %v564 = vld [vmem:[%s0 + $0x54] sm:$0xf]
  %v565 = vld [vmem:[%s0 + $0x58] sm:$0xf]
  %v566 = vld [vmem:[%s0 + $0x5c] sm:$0xf]
  %v567 = vld [vmem:[%s0 + $0x60] sm:$0xf]
  %v568 = vld [vmem:[%s0 + $0x64] sm:$0xf]
  %v569 = vld [vmem:[%s0 + $0x68] sm:$0xf]
  %v570 = vld [vmem:[%s0 + $0x6c] sm:$0xf]
  %v571 = vld [vmem:[%s0 + $0x70] sm:$0xf]
  %v572 = vld [vmem:[%s0 + $0x74] sm:$0xf]
  %v573 = vld [vmem:[%s0 + $0x78] sm:$0xf]
  %v574 = vld [vmem:[%s0 + $0x7c] sm:$0xf]
  %v575 = vld [vmem:[%s1] sm:$0xff]
  %v576 = vld [vmem:[%s1 + $0x8] sm:$0xff]
  %v577 = vld [vmem:[%s1 + $0x10] sm:$0xff]
  %v578 = vld [vmem:[%s1 + $0x18] sm:$0xff]
  %v579 = vld [vmem:[%s1 + $0x20] sm:$0xff]
  %v580 = vld [vmem:[%s1 + $0x28] sm:$0xff]
  %v581 = vld [vmem:[%s1 + $0x30] sm:$0xff]
  %v582 = vld [vmem:[%s1 + $0x38] sm:$0xff]
  %v583 = vld [vmem:[%s1 + $0x40] sm:$0xff]
  %v584 = vld [vmem:[%s1 + $0x48] sm:$0xff]
  %v585 = vld [vmem:[%s1 + $0x50] sm:$0xff]
  %v586 = vld [vmem:[%s1 + $0x58] sm:$0xff]
  %v587 = vld [vmem:[%s1 + $0x60] sm:$0xff]
  %v588 = vld [vmem:[%s1 + $0x68] sm:$0xff]
  %v589 = vld [vmem:[%s1 + $0x70] sm:$0xff]
  %v590 = vld [vmem:[%s1 + $0x78] sm:$0xff]
  %v591 = vld [vmem:[%s1 + $0x80] sm:$0xff]
  %v592 = vld [vmem:[%s1 + $0x88] sm:$0xff]
  %v593 = vld [vmem:[%s1 + $0x90] sm:$0xff]
  %v594 = vld [vmem:[%s1 + $0x98] sm:$0xff]
  %v595 = vld [vmem:[%s1 + $0xa0] sm:$0xff]
  %v596 = vld [vmem:[%s1 + $0xa8] sm:$0xff]
  %v597 = vld [vmem:[%s1 + $0xb0] sm:$0xff]
  %v598 = vld [vmem:[%s1 + $0xb8] sm:$0xff]
  %v599 = vld [vmem:[%s2] sm:$0xf]
  %v601 = vperm.slane %v599, 0
  %v602 = vperm.slane %v599, 1
  %v603 = vperm.slane %v599, 2
  %v604 = vperm.slane %v599, 3
  %v641 = vunpack.c.l.b16 %v543
  %v642 = vunpack.c.l.b16 %v544
  %v643 = vunpack.c.l.b16 %v545
  %v644 = vunpack.c.l.b16 %v546
  %v645 = vunpack.c.l.b16 %v547
  %v646 = vunpack.c.l.b16 %v548
  %v647 = vunpack.c.l.b16 %v549
  %v648 = vunpack.c.l.b16 %v550
  %v649 = vunpack.c.l.b16 %v551
  %v650 = vunpack.c.l.b16 %v552
  %v651 = vunpack.c.l.b16 %v553
  %v652 = vunpack.c.l.b16 %v554
  %v653 = vunpack.c.l.b16 %v555
  %v654 = vunpack.c.l.b16 %v556
  %v655 = vunpack.c.l.b16 %v557
  %v656 = vunpack.c.l.b16 %v558
  %v657 = vunpack.c.l.b16 %v559
  %v658 = vunpack.c.l.b16 %v560
  %v659 = vunpack.c.l.b16 %v561
  %v660 = vunpack.c.l.b16 %v562
  %v661 = vunpack.c.l.b16 %v563
  %v662 = vunpack.c.l.b16 %v564
  %v663 = vunpack.c.l.b16 %v565
  %v664 = vunpack.c.l.b16 %v566
  %v665 = vunpack.c.l.b16 %v567
  %v666 = vunpack.c.l.b16 %v568
  %v667 = vunpack.c.l.b16 %v569
  %v668 = vunpack.c.l.b16 %v570
  %v669 = vunpack.c.l.b16 %v571
  %v670 = vunpack.c.l.b16 %v572
  %v671 = vunpack.c.l.b16 %v573
  %v672 = vunpack.c.l.b16 %v574
  %v673 = vpack.c.b16 %v642, %v641
  %v674 = vpack.c.b16 %v644, %v643
  %v675 = vpack.c.b16 %v646, %v645
  %v676 = vpack.c.b16 %v648, %v647
  %v677 = vpack.c.b16 %v650, %v649
  %v678 = vpack.c.b16 %v652, %v651
  %v679 = vpack.c.b16 %v654, %v653
  %v680 = vpack.c.b16 %v656, %v655
  %v681 = vpack.c.b16 %v658, %v657
  %v682 = vpack.c.b16 %v660, %v659
  %v683 = vpack.c.b16 %v662, %v661
  %v684 = vpack.c.b16 %v664, %v663
  %v685 = vpack.c.b16 %v666, %v665
  %v686 = vpack.c.b16 %v668, %v667
  %v687 = vpack.c.b16 %v670, %v669
  %v688 = vpack.c.b16 %v672, %v671
  %v713 = vunpack.c.l.b16 %v575
  %v714 = vunpack.c.h.b16 %v575
  %v715 = vunpack.c.l.b16 %v576
  %v716 = vunpack.c.h.b16 %v576
  %v717 = vunpack.c.l.b16 %v577
  %v718 = vunpack.c.h.b16 %v577
  %v719 = vunpack.c.l.b16 %v578
  %v720 = vunpack.c.h.b16 %v578
  %v721 = vunpack.c.l.b16 %v579
  %v722 = vunpack.c.h.b16 %v579
  %v723 = vunpack.c.l.b16 %v580
  %v724 = vunpack.c.h.b16 %v580
  %v725 = vunpack.c.l.b16 %v581
  %v726 = vunpack.c.h.b16 %v581
  %v727 = vunpack.c.l.b16 %v582
  %v728 = vunpack.c.h.b16 %v582
  %v729 = vunpack.c.l.b16 %v583
  %v730 = vunpack.c.h.b16 %v583
  %v731 = vunpack.c.l.b16 %v584
  %v732 = vunpack.c.h.b16 %v584
  %v733 = vunpack.c.l.b16 %v585
  %v734 = vunpack.c.h.b16 %v585
  %v735 = vunpack.c.l.b16 %v586
  %v736 = vunpack.c.h.b16 %v586
  %v737 = vunpack.c.l.b16 %v587
  %v738 = vunpack.c.h.b16 %v587
  %v739 = vunpack.c.l.b16 %v588
  %v740 = vunpack.c.h.b16 %v588
  %v741 = vunpack.c.l.b16 %v589
  %v742 = vunpack.c.h.b16 %v589
  %v743 = vunpack.c.l.b16 %v590
  %v744 = vunpack.c.h.b16 %v590
  %v745 = vunpack.c.l.b16 %v591
  %v746 = vunpack.c.h.b16 %v591
  %v747 = vunpack.c.l.b16 %v592
  %v748 = vunpack.c.h.b16 %v592
  %v749 = vunpack.c.l.b16 %v593
  %v750 = vunpack.c.h.b16 %v593
  %v751 = vunpack.c.l.b16 %v594
  %v752 = vunpack.c.h.b16 %v594
  %v753 = vunpack.c.l.b16 %v595
  %v754 = vunpack.c.h.b16 %v595
  %v755 = vunpack.c.l.b16 %v596
  %v756 = vunpack.c.h.b16 %v596
  %v757 = vunpack.c.l.b16 %v597
  %v758 = vunpack.c.h.b16 %v597
  %v759 = vunpack.c.l.b16 %v598
  %v760 = vunpack.c.h.b16 %v598
  %v761 = vpack.c.b16 %v717, %v713
  %v762 = vpack.c.b16 %v718, %v714
  %v763 = vpack.c.b16 %v719, %v715
  %v764 = vpack.c.b16 %v720, %v716
  %v765 = vpack.c.b16 %v725, %v721
  %v766 = vpack.c.b16 %v726, %v722
  %v767 = vpack.c.b16 %v727, %v723
  %v768 = vpack.c.b16 %v728, %v724
  %v769 = vpack.c.b16 %v733, %v729
  %v770 = vpack.c.b16 %v734, %v730
  %v771 = vpack.c.b16 %v735, %v731
  %v772 = vpack.c.b16 %v736, %v732
  %v773 = vpack.c.b16 %v741, %v737
  %v774 = vpack.c.b16 %v742, %v738
  %v775 = vpack.c.b16 %v743, %v739
  %v776 = vpack.c.b16 %v744, %v740
  %v777 = vpack.c.b16 %v749, %v745
  %v778 = vpack.c.b16 %v750, %v746
  %v779 = vpack.c.b16 %v751, %v747
  %v780 = vpack.c.b16 %v752, %v748
  %v781 = vpack.c.b16 %v757, %v753
  %v782 = vpack.c.b16 %v758, %v754
  %v783 = vpack.c.b16 %v759, %v755
  %v784 = vpack.c.b16 %v760, %v756
  %vm809 = vcmask 785408
  %v811 = vsel %vm809, %v673, 0
  %v814 = vsel %vm809, %v674, 0
  %v817 = vsel %vm809, %v675, 0
  %v820 = vsel %vm809, %v676, 0
  %v823 = vsel %vm809, %v677, 0
  %v826 = vsel %vm809, %v678, 0
  %v829 = vsel %vm809, %v679, 0
  %v832 = vsel %vm809, %v680, 0
  %v835 = vsel %vm809, %v681, 0
  %v838 = vsel %vm809, %v682, 0
  %v841 = vsel %vm809, %v683, 0
  %v844 = vsel %vm809, %v684, 0
  %v847 = vsel %vm809, %v685, 0
  %v850 = vsel %vm809, %v686, 0
  %v853 = vsel %vm809, %v687, 0
  %v856 = vsel %vm809, %v688, 0
  %858 = vmatpush.bf16.msra.mxu0 0
  %859 = vmatpush.bf16.msra.mxu0 0
  %860 = vmatpush.bf16.msra.mxu0 %v781
  %861 = vmatpush.bf16.msra.mxu0 %v777
  %862 = vmatpush.bf16.msra.mxu0 %v773
  %863 = vmatpush.bf16.msra.mxu0 %v769
  %864 = vmatpush.bf16.msra.mxu0 %v765
  %865 = vmatpush.bf16.msra.mxu0 %v761
  %866 = vmatmul.bf16.gmra.mxu0 %v811
  %v867 = vpop.f32.mrf.mxu0
  %v868 = vadd.f32 %v601, %v867
  %v869 = vpop.f32.mrf.mxu0
  %v870 = vadd.f32 %v601, %v869
  %871 = vmatmul.bf16.gmra.mxu0 %v814
  %v872 = vpop.f32.mrf.mxu0
  %v873 = vadd.f32 %v601, %v872
  %v874 = vpop.f32.mrf.mxu0
  %v875 = vadd.f32 %v601, %v874
  %876 = vmatmul.bf16.gmra.mxu0 %v817
  %v877 = vpop.f32.mrf.mxu0
  %v878 = vadd.f32 %v601, %v877
  %v879 = vpop.f32.mrf.mxu0
  %v880 = vadd.f32 %v601, %v879
  %881 = vmatmul.bf16.gmra.mxu0 %v820
  %v882 = vpop.f32.mrf.mxu0
  %v883 = vadd.f32 %v601, %v882
  %v884 = vpop.f32.mrf.mxu0
  %v885 = vadd.f32 %v601, %v884
  %886 = vmatmul.bf16.gmra.mxu0 %v823
  %v887 = vpop.f32.mrf.mxu0
  %v888 = vadd.f32 %v601, %v887
  %v889 = vpop.f32.mrf.mxu0
  %v890 = vadd.f32 %v601, %v889
  %891 = vmatmul.bf16.gmra.mxu0 %v826
  %v892 = vpop.f32.mrf.mxu0
  %v893 = vadd.f32 %v601, %v892
  %v894 = vpop.f32.mrf.mxu0
  %v895 = vadd.f32 %v601, %v894
  %896 = vmatmul.bf16.gmra.mxu0 %v829
  %v897 = vpop.f32.mrf.mxu0
  %v898 = vadd.f32 %v601, %v897
  %v899 = vpop.f32.mrf.mxu0
  %v900 = vadd.f32 %v601, %v899
  %901 = vmatmul.bf16.gmra.mxu0 %v832
  %v902 = vpop.f32.mrf.mxu0
  %v903 = vadd.f32 %v601, %v902
  %v904 = vpop.f32.mrf.mxu0
  %v905 = vadd.f32 %v601, %v904
  %906 = vmatmul.bf16.gmra.mxu0 %v835
  %v907 = vpop.f32.mrf.mxu0
  %v908 = vadd.f32 %v601, %v907
  %v909 = vpop.f32.mrf.mxu0
  %v910 = vadd.f32 %v601, %v909
  %911 = vmatmul.bf16.gmra.mxu0 %v838
  %v912 = vpop.f32.mrf.mxu0
  %v913 = vadd.f32 %v601, %v912
  %v914 = vpop.f32.mrf.mxu0
  %v915 = vadd.f32 %v601, %v914
  %916 = vmatmul.bf16.gmra.mxu0 %v841
  %v917 = vpop.f32.mrf.mxu0
  %v918 = vadd.f32 %v601, %v917
  %v919 = vpop.f32.mrf.mxu0
  %v920 = vadd.f32 %v601, %v919
  %921 = vmatmul.bf16.gmra.mxu0 %v844
  %v922 = vpop.f32.mrf.mxu0
  %v923 = vadd.f32 %v601, %v922
  %v924 = vpop.f32.mrf.mxu0
  %v925 = vadd.f32 %v601, %v924
  %926 = vmatmul.bf16.gmra.mxu0 %v847
  %v927 = vpop.f32.mrf.mxu0
  %v928 = vadd.f32 %v601, %v927
  %v929 = vpop.f32.mrf.mxu0
  %v930 = vadd.f32 %v601, %v929
  %931 = vmatmul.bf16.gmra.mxu0 %v850
  %v932 = vpop.f32.mrf.mxu0
  %v933 = vadd.f32 %v601, %v932
  %v934 = vpop.f32.mrf.mxu0
  %v935 = vadd.f32 %v601, %v934
  %936 = vmatmul.bf16.gmra.mxu0 %v853
  %v937 = vpop.f32.mrf.mxu0
  %v938 = vadd.f32 %v601, %v937
  %v939 = vpop.f32.mrf.mxu0
  %v940 = vadd.f32 %v601, %v939
  %941 = vmatmul.bf16.gmra.mxu0 %v856
  %v942 = vpop.f32.mrf.mxu0
  %v943 = vadd.f32 %v601, %v942
  %v944 = vpop.f32.mrf.mxu0
  %v945 = vadd.f32 %v601, %v944
  %946 = vdwg.mxu0
  %947 = vmatpush.bf16.msra.mxu0 0
  %948 = vmatpush.bf16.msra.mxu0 0
  %949 = vmatpush.bf16.msra.mxu0 %v782
  %950 = vmatpush.bf16.msra.mxu0 %v778
  %951 = vmatpush.bf16.msra.mxu0 %v774
  %952 = vmatpush.bf16.msra.mxu0 %v770
  %953 = vmatpush.bf16.msra.mxu0 %v766
  %954 = vmatpush.bf16.msra.mxu0 %v762
  %955 = vmatmul.bf16.gmra.mxu0 %v811
  %v956 = vpop.f32.mrf.mxu0
  %v957 = vadd.f32 %v602, %v956
  %v958 = vpop.f32.mrf.mxu0
  %v959 = vadd.f32 %v602, %v958
  %960 = vmatmul.bf16.gmra.mxu0 %v814
  %v961 = vpop.f32.mrf.mxu0
  %v962 = vadd.f32 %v602, %v961
  %v963 = vpop.f32.mrf.mxu0
  %v964 = vadd.f32 %v602, %v963
  %965 = vmatmul.bf16.gmra.mxu0 %v817
  %v966 = vpop.f32.mrf.mxu0
  %v967 = vadd.f32 %v602, %v966
  %v968 = vpop.f32.mrf.mxu0
  %v969 = vadd.f32 %v602, %v968
  %970 = vmatmul.bf16.gmra.mxu0 %v820
  %v971 = vpop.f32.mrf.mxu0
  %v972 = vadd.f32 %v602, %v971
  %v973 = vpop.f32.mrf.mxu0
  %v974 = vadd.f32 %v602, %v973
  %975 = vmatmul.bf16.gmra.mxu0 %v823
  %v976 = vpop.f32.mrf.mxu0
  %v977 = vadd.f32 %v602, %v976
  %v978 = vpop.f32.mrf.mxu0
  %v979 = vadd.f32 %v602, %v978
  %980 = vmatmul.bf16.gmra.mxu0 %v826
  %v981 = vpop.f32.mrf.mxu0
  %v982 = vadd.f32 %v602, %v981
  %v983 = vpop.f32.mrf.mxu0
  %v984 = vadd.f32 %v602, %v983
  %985 = vmatmul.bf16.gmra.mxu0 %v829
  %v986 = vpop.f32.mrf.mxu0
  %v987 = vadd.f32 %v602, %v986
  %v988 = vpop.f32.mrf.mxu0
  %v989 = vadd.f32 %v602, %v988
  %990 = vmatmul.bf16.gmra.mxu0 %v832
  %v991 = vpop.f32.mrf.mxu0
  %v992 = vadd.f32 %v602, %v991
  %v993 = vpop.f32.mrf.mxu0
  %v994 = vadd.f32 %v602, %v993
  %995 = vmatmul.bf16.gmra.mxu0 %v835
  %v996 = vpop.f32.mrf.mxu0
  %v997 = vadd.f32 %v602, %v996
  %v998 = vpop.f32.mrf.mxu0
  %v999 = vadd.f32 %v602, %v998
  %1000 = vmatmul.bf16.gmra.mxu0 %v838
  %v1001 = vpop.f32.mrf.mxu0
  %v1002 = vadd.f32 %v602, %v1001
  %v1003 = vpop.f32.mrf.mxu0
  %v1004 = vadd.f32 %v602, %v1003
  %1005 = vmatmul.bf16.gmra.mxu0 %v841
  %v1006 = vpop.f32.mrf.mxu0
  %v1007 = vadd.f32 %v602, %v1006
  %v1008 = vpop.f32.mrf.mxu0
  %v1009 = vadd.f32 %v602, %v1008
  %1010 = vmatmul.bf16.gmra.mxu0 %v844
  %v1011 = vpop.f32.mrf.mxu0
  %v1012 = vadd.f32 %v602, %v1011
  %v1013 = vpop.f32.mrf.mxu0
  %v1014 = vadd.f32 %v602, %v1013
  %1015 = vmatmul.bf16.gmra.mxu0 %v847
  %v1016 = vpop.f32.mrf.mxu0
  %v1017 = vadd.f32 %v602, %v1016
  %v1018 = vpop.f32.mrf.mxu0
  %v1019 = vadd.f32 %v602, %v1018
  %1020 = vmatmul.bf16.gmra.mxu0 %v850
  %v1021 = vpop.f32.mrf.mxu0
  %v1022 = vadd.f32 %v602, %v1021
  %v1023 = vpop.f32.mrf.mxu0
  %v1024 = vadd.f32 %v602, %v1023
  %1025 = vmatmul.bf16.gmra.mxu0 %v853
  %v1026 = vpop.f32.mrf.mxu0
  %v1027 = vadd.f32 %v602, %v1026
  %v1028 = vpop.f32.mrf.mxu0
  %v1029 = vadd.f32 %v602, %v1028
  %1030 = vmatmul.bf16.gmra.mxu0 %v856
  %v1031 = vpop.f32.mrf.mxu0
  %v1032 = vadd.f32 %v602, %v1031
  %v1033 = vpop.f32.mrf.mxu0
  %v1034 = vadd.f32 %v602, %v1033
  %1035 = vdwg.mxu0
  %1036 = vmatpush.bf16.msra.mxu0 0
  %1037 = vmatpush.bf16.msra.mxu0 0
  %1038 = vmatpush.bf16.msra.mxu0 %v783
  %1039 = vmatpush.bf16.msra.mxu0 %v779
  %1040 = vmatpush.bf16.msra.mxu0 %v775
  %1041 = vmatpush.bf16.msra.mxu0 %v771
  %1042 = vmatpush.bf16.msra.mxu0 %v767
  %1043 = vmatpush.bf16.msra.mxu0 %v763
  %1044 = vmatmul.bf16.gmra.mxu0 %v811
  %v1045 = vpop.f32.mrf.mxu0
  %v1046 = vadd.f32 %v603, %v1045
  %v1047 = vpop.f32.mrf.mxu0
  %v1048 = vadd.f32 %v603, %v1047
  %1049 = vmatmul.bf16.gmra.mxu0 %v814
  %v1050 = vpop.f32.mrf.mxu0
  %v1051 = vadd.f32 %v603, %v1050
  %v1052 = vpop.f32.mrf.mxu0
  %v1053 = vadd.f32 %v603, %v1052
  %1054 = vmatmul.bf16.gmra.mxu0 %v817
  %v1055 = vpop.f32.mrf.mxu0
  %v1056 = vadd.f32 %v603, %v1055
  %v1057 = vpop.f32.mrf.mxu0
  %v1058 = vadd.f32 %v603, %v1057
  %1059 = vmatmul.bf16.gmra.mxu0 %v820
  %v1060 = vpop.f32.mrf.mxu0
  %v1061 = vadd.f32 %v603, %v1060
  %v1062 = vpop.f32.mrf.mxu0
  %v1063 = vadd.f32 %v603, %v1062
  %1064 = vmatmul.bf16.gmra.mxu0 %v823
  %v1065 = vpop.f32.mrf.mxu0
  %v1066 = vadd.f32 %v603, %v1065
  %v1067 = vpop.f32.mrf.mxu0
  %v1068 = vadd.f32 %v603, %v1067
  %1069 = vmatmul.bf16.gmra.mxu0 %v826
  %v1070 = vpop.f32.mrf.mxu0
  %v1071 = vadd.f32 %v603, %v1070
  %v1072 = vpop.f32.mrf.mxu0
  %v1073 = vadd.f32 %v603, %v1072
  %1074 = vmatmul.bf16.gmra.mxu0 %v829
  %v1075 = vpop.f32.mrf.mxu0
  %v1076 = vadd.f32 %v603, %v1075
  %v1077 = vpop.f32.mrf.mxu0
  %v1078 = vadd.f32 %v603, %v1077
  %1079 = vmatmul.bf16.gmra.mxu0 %v832
  %v1080 = vpop.f32.mrf.mxu0
  %v1081 = vadd.f32 %v603, %v1080
  %v1082 = vpop.f32.mrf.mxu0
  %v1083 = vadd.f32 %v603, %v1082
  %1084 = vmatmul.bf16.gmra.mxu0 %v835
  %v1085 = vpop.f32.mrf.mxu0
  %v1086 = vadd.f32 %v603, %v1085
  %v1087 = vpop.f32.mrf.mxu0
  %v1088 = vadd.f32 %v603, %v1087
  %1089 = vmatmul.bf16.gmra.mxu0 %v838
  %v1090 = vpop.f32.mrf.mxu0
  %v1091 = vadd.f32 %v603, %v1090
  %v1092 = vpop.f32.mrf.mxu0
  %v1093 = vadd.f32 %v603, %v1092
  %1094 = vmatmul.bf16.gmra.mxu0 %v841
  %v1095 = vpop.f32.mrf.mxu0
  %v1096 = vadd.f32 %v603, %v1095
  %v1097 = vpop.f32.mrf.mxu0
  %v1098 = vadd.f32 %v603, %v1097
  %1099 = vmatmul.bf16.gmra.mxu0 %v844
  %v1100 = vpop.f32.mrf.mxu0
  %v1101 = vadd.f32 %v603, %v1100
  %v1102 = vpop.f32.mrf.mxu0
  %v1103 = vadd.f32 %v603, %v1102
  %1104 = vmatmul.bf16.gmra.mxu0 %v847
  %v1105 = vpop.f32.mrf.mxu0
  %v1106 = vadd.f32 %v603, %v1105
  %v1107 = vpop.f32.mrf.mxu0
  %v1108 = vadd.f32 %v603, %v1107
  %1109 = vmatmul.bf16.gmra.mxu0 %v850
  %v1110 = vpop.f32.mrf.mxu0
  %v1111 = vadd.f32 %v603, %v1110
  %v1112 = vpop.f32.mrf.mxu0
  %v1113 = vadd.f32 %v603, %v1112
  %1114 = vmatmul.bf16.gmra.mxu0 %v853
  %v1115 = vpop.f32.mrf.mxu0
  %v1116 = vadd.f32 %v603, %v1115
  %v1117 = vpop.f32.mrf.mxu0
  %v1118 = vadd.f32 %v603, %v1117
  %1119 = vmatmul.bf16.gmra.mxu0 %v856
  %v1120 = vpop.f32.mrf.mxu0
  %v1121 = vadd.f32 %v603, %v1120
  %v1122 = vpop.f32.mrf.mxu0
  %v1123 = vadd.f32 %v603, %v1122
  %1124 = vdwg.mxu0
  %1125 = vmatpush.bf16.msra.mxu0 0
  %1126 = vmatpush.bf16.msra.mxu0 0
  %1127 = vmatpush.bf16.msra.mxu0 %v784
  %1128 = vmatpush.bf16.msra.mxu0 %v780
  %1129 = vmatpush.bf16.msra.mxu0 %v776
  %1130 = vmatpush.bf16.msra.mxu0 %v772
  %1131 = vmatpush.bf16.msra.mxu0 %v768
  %1132 = vmatpush.bf16.msra.mxu0 %v764
  %1133 = vmatmul.bf16.gmra.mxu0 %v811
  %v1134 = vpop.f32.mrf.mxu0
  %v1135 = vadd.f32 %v604, %v1134
  %v1136 = vpop.f32.mrf.mxu0
  %v1137 = vadd.f32 %v604, %v1136
  %1138 = vmatmul.bf16.gmra.mxu0 %v814
  %v1139 = vpop.f32.mrf.mxu0
  %v1140 = vadd.f32 %v604, %v1139
  %v1141 = vpop.f32.mrf.mxu0
  %v1142 = vadd.f32 %v604, %v1141
  %1143 = vmatmul.bf16.gmra.mxu0 %v817
  %v1144 = vpop.f32.mrf.mxu0
  %v1145 = vadd.f32 %v604, %v1144
  %v1146 = vpop.f32.mrf.mxu0
  %v1147 = vadd.f32 %v604, %v1146
  %1148 = vmatmul.bf16.gmra.mxu0 %v820
  %v1149 = vpop.f32.mrf.mxu0
  %v1150 = vadd.f32 %v604, %v1149
  %v1151 = vpop.f32.mrf.mxu0
  %v1152 = vadd.f32 %v604, %v1151
  %1153 = vmatmul.bf16.gmra.mxu0 %v823
  %v1154 = vpop.f32.mrf.mxu0
  %v1155 = vadd.f32 %v604, %v1154
  %v1156 = vpop.f32.mrf.mxu0
  %v1157 = vadd.f32 %v604, %v1156
  %1158 = vmatmul.bf16.gmra.mxu0 %v826
  %v1159 = vpop.f32.mrf.mxu0
  %v1160 = vadd.f32 %v604, %v1159
  %v1161 = vpop.f32.mrf.mxu0
  %v1162 = vadd.f32 %v604, %v1161
  %1163 = vmatmul.bf16.gmra.mxu0 %v829
  %v1164 = vpop.f32.mrf.mxu0
  %v1165 = vadd.f32 %v604, %v1164
  %v1166 = vpop.f32.mrf.mxu0
  %v1167 = vadd.f32 %v604, %v1166
  %1168 = vmatmul.bf16.gmra.mxu0 %v832
  %v1169 = vpop.f32.mrf.mxu0
  %v1170 = vadd.f32 %v604, %v1169
  %v1171 = vpop.f32.mrf.mxu0
  %v1172 = vadd.f32 %v604, %v1171
  %1173 = vmatmul.bf16.gmra.mxu0 %v835
  %v1174 = vpop.f32.mrf.mxu0
  %v1175 = vadd.f32 %v604, %v1174
  %v1176 = vpop.f32.mrf.mxu0
  %v1177 = vadd.f32 %v604, %v1176
  %1178 = vmatmul.bf16.gmra.mxu0 %v838
  %v1179 = vpop.f32.mrf.mxu0
  %v1180 = vadd.f32 %v604, %v1179
  %v1181 = vpop.f32.mrf.mxu0
  %v1182 = vadd.f32 %v604, %v1181
  %1183 = vmatmul.bf16.gmra.mxu0 %v841
  %v1184 = vpop.f32.mrf.mxu0
  %v1185 = vadd.f32 %v604, %v1184
  %v1186 = vpop.f32.mrf.mxu0
  %v1187 = vadd.f32 %v604, %v1186
  %1188 = vmatmul.bf16.gmra.mxu0 %v844
  %v1189 = vpop.f32.mrf.mxu0
  %v1190 = vadd.f32 %v604, %v1189
  %v1191 = vpop.f32.mrf.mxu0
  %v1192 = vadd.f32 %v604, %v1191
  %1193 = vmatmul.bf16.gmra.mxu0 %v847
  %v1194 = vpop.f32.mrf.mxu0
  %v1195 = vadd.f32 %v604, %v1194
  %v1196 = vpop.f32.mrf.mxu0
  %v1197 = vadd.f32 %v604, %v1196
  %1198 = vmatmul.bf16.gmra.mxu0 %v850
  %v1199 = vpop.f32.mrf.mxu0
  %v1200 = vadd.f32 %v604, %v1199
  %v1201 = vpop.f32.mrf.mxu0
  %v1202 = vadd.f32 %v604, %v1201
  %1203 = vmatmul.bf16.gmra.mxu0 %v853
  %v1204 = vpop.f32.mrf.mxu0
  %v1205 = vadd.f32 %v604, %v1204
  %v1206 = vpop.f32.mrf.mxu0
  %v1207 = vadd.f32 %v604, %v1206
  %1208 = vmatmul.bf16.gmra.mxu0 %v856
  %v1209 = vpop.f32.mrf.mxu0
  %v1210 = vadd.f32 %v604, %v1209
  %v1211 = vpop.f32.mrf.mxu0
  %v1212 = vadd.f32 %v604, %v1211
  %1213 = vdwg.mxu0
  %v1214 = vmul.f32 %v868, %v415
  %v1215 = vmul.f32 %v957, %v416
  %v1216 = vmul.f32 %v1046, %v417
  %v1217 = vmul.f32 %v1135, %v418
  %v1218 = vmul.f32 %v870, %v419
  %v1219 = vmul.f32 %v959, %v420
  %v1220 = vmul.f32 %v1048, %v421
  %v1221 = vmul.f32 %v1137, %v422
  %v1222 = vmul.f32 %v873, %v423
  %v1223 = vmul.f32 %v962, %v424
  %v1224 = vmul.f32 %v1051, %v425
  %v1225 = vmul.f32 %v1140, %v426
  %v1226 = vmul.f32 %v875, %v427
  %v1227 = vmul.f32 %v964, %v428
  %v1228 = vmul.f32 %v1053, %v429
  %v1229 = vmul.f32 %v1142, %v430
  %v1230 = vmul.f32 %v878, %v431
  %v1231 = vmul.f32 %v967, %v432
  %v1232 = vmul.f32 %v1056, %v433
  %v1233 = vmul.f32 %v1145, %v434
  %v1234 = vmul.f32 %v880, %v435
  %v1235 = vmul.f32 %v969, %v436
  %v1236 = vmul.f32 %v1058, %v437
  %v1237 = vmul.f32 %v1147, %v438
  %v1238 = vmul.f32 %v883, %v439
  %v1239 = vmul.f32 %v972, %v440
  %v1240 = vmul.f32 %v1061, %v441
  %v1241 = vmul.f32 %v1150, %v442
  %v1242 = vmul.f32 %v885, %v443
  %v1243 = vmul.f32 %v974, %v444
  %v1244 = vmul.f32 %v1063, %v445
  %v1245 = vmul.f32 %v1152, %v446
  %v1246 = vmul.f32 %v888, %v447
  %v1247 = vmul.f32 %v977, %v448
  %v1248 = vmul.f32 %v1066, %v449
  %v1249 = vmul.f32 %v1155, %v450
  %v1250 = vmul.f32 %v890, %v451
  %v1251 = vmul.f32 %v979, %v452
  %v1252 = vmul.f32 %v1068, %v453
  %v1253 = vmul.f32 %v1157, %v454
  %v1254 = vmul.f32 %v893, %v455
  %v1255 = vmul.f32 %v982, %v456
  %v1256 = vmul.f32 %v1071, %v457
  %v1257 = vmul.f32 %v1160, %v458
  %v1258 = vmul.f32 %v895, %v459
  %v1259 = vmul.f32 %v984, %v460
  %v1260 = vmul.f32 %v1073, %v461
  %v1261 = vmul.f32 %v1162, %v462
  %v1262 = vmul.f32 %v898, %v463
  %v1263 = vmul.f32 %v987, %v464
  %v1264 = vmul.f32 %v1076, %v465
  %v1265 = vmul.f32 %v1165, %v466
  %v1266 = vmul.f32 %v900, %v467
  %v1267 = vmul.f32 %v989, %v468
  %v1268 = vmul.f32 %v1078, %v469
  %v1269 = vmul.f32 %v1167, %v470
  %v1270 = vmul.f32 %v903, %v471
  %v1271 = vmul.f32 %v992, %v472
  %v1272 = vmul.f32 %v1081, %v473
  %v1273 = vmul.f32 %v1170, %v474
  %v1274 = vmul.f32 %v905, %v475
  %v1275 = vmul.f32 %v994, %v476
  %v1276 = vmul.f32 %v1083, %v477
  %v1277 = vmul.f32 %v1172, %v478
  %v1278 = vmul.f32 %v908, %v479
  %v1279 = vmul.f32 %v997, %v480
  %v1280 = vmul.f32 %v1086, %v481
  %v1281 = vmul.f32 %v1175, %v482
  %v1282 = vmul.f32 %v910, %v483
  %v1283 = vmul.f32 %v999, %v484
  %v1284 = vmul.f32 %v1088, %v485
  %v1285 = vmul.f32 %v1177, %v486
  %v1286 = vmul.f32 %v913, %v487
  %v1287 = vmul.f32 %v1002, %v488
  %v1288 = vmul.f32 %v1091, %v489
  %v1289 = vmul.f32 %v1180, %v490
  %v1290 = vmul.f32 %v915, %v491
  %v1291 = vmul.f32 %v1004, %v492
  %v1292 = vmul.f32 %v1093, %v493
  %v1293 = vmul.f32 %v1182, %v494
  %v1294 = vmul.f32 %v918, %v495
  %v1295 = vmul.f32 %v1007, %v496
  %v1296 = vmul.f32 %v1096, %v497
  %v1297 = vmul.f32 %v1185, %v498
  %v1298 = vmul.f32 %v920, %v499
  %v1299 = vmul.f32 %v1009, %v500
  %v1300 = vmul.f32 %v1098, %v501
  %v1301 = vmul.f32 %v1187, %v502
  %v1302 = vmul.f32 %v923, %v503
  %v1303 = vmul.f32 %v1012, %v504
  %v1304 = vmul.f32 %v1101, %v505
  %v1305 = vmul.f32 %v1190, %v506
  %v1306 = vmul.f32 %v925, %v507
  %v1307 = vmul.f32 %v1014, %v508
  %v1308 = vmul.f32 %v1103, %v509
  %v1309 = vmul.f32 %v1192, %v510
  %v1310 = vmul.f32 %v928, %v511
  %v1311 = vmul.f32 %v1017, %v512
  %v1312 = vmul.f32 %v1106, %v513
  %v1313 = vmul.f32 %v1195, %v514
  %v1314 = vmul.f32 %v930, %v515
  %v1315 = vmul.f32 %v1019, %v516
  %v1316 = vmul.f32 %v1108, %v517
  %v1317 = vmul.f32 %v1197, %v518
  %v1318 = vmul.f32 %v933, %v519
  %v1319 = vmul.f32 %v1022, %v520
  %v1320 = vmul.f32 %v1111, %v521
  %v1321 = vmul.f32 %v1200, %v522
  %v1322 = vmul.f32 %v935, %v523
  %v1323 = vmul.f32 %v1024, %v524
  %v1324 = vmul.f32 %v1113, %v525
  %v1325 = vmul.f32 %v1202, %v526
  %v1326 = vmul.f32 %v938, %v527
  %v1327 = vmul.f32 %v1027, %v528
  %v1328 = vmul.f32 %v1116, %v529
  %v1329 = vmul.f32 %v1205, %v530
  %v1330 = vmul.f32 %v940, %v531
  %v1331 = vmul.f32 %v1029, %v532
  %v1332 = vmul.f32 %v1118, %v533
  %v1333 = vmul.f32 %v1207, %v534
  %v1334 = vmul.f32 %v943, %v535
  %v1335 = vmul.f32 %v1032, %v536
  %v1336 = vmul.f32 %v1121, %v537
  %v1337 = vmul.f32 %v1210, %v538
  %v1338 = vmul.f32 %v945, %v539
  %v1339 = vmul.f32 %v1034, %v540
  %v1340 = vmul.f32 %v1123, %v541
  %v1341 = vmul.f32 %v1212, %v542
  %1342 = vst [vmem:[%s5] sm:$0xff] %v1214
  %1343 = vst [vmem:[%s5 + $0x8] sm:$0xff] %v1215
  %1344 = vst [vmem:[%s5 + $0x10] sm:$0xff] %v1216
  %vm1345 = vcmask 130048
  %1346 = vst.msk [vmem:[%s5 + $0x18] sm:$0xff] %vm1345, %v1217
  %1347 = vst [vmem:[%s5 + $0x20] sm:$0xff] %v1218
  %1348 = vst [vmem:[%s5 + $0x28] sm:$0xff] %v1219
  %1349 = vst [vmem:[%s5 + $0x30] sm:$0xff] %v1220
  %1350 = vst.msk [vmem:[%s5 + $0x38] sm:$0xff] %vm1345, %v1221
  %1351 = vst [vmem:[%s5 + $0x40] sm:$0xff] %v1222
  %1352 = vst [vmem:[%s5 + $0x48] sm:$0xff] %v1223
  %1353 = vst [vmem:[%s5 + $0x50] sm:$0xff] %v1224
  %1354 = vst.msk [vmem:[%s5 + $0x58] sm:$0xff] %vm1345, %v1225
  %1355 = vst [vmem:[%s5 + $0x60] sm:$0xff] %v1226
  %1356 = vst [vmem:[%s5 + $0x68] sm:$0xff] %v1227
  %1357 = vst [vmem:[%s5 + $0x70] sm:$0xff] %v1228
  %1358 = vst.msk [vmem:[%s5 + $0x78] sm:$0xff] %vm1345, %v1229
  %1359 = vst [vmem:[%s5 + $0x80] sm:$0xff] %v1230
  %1360 = vst [vmem:[%s5 + $0x88] sm:$0xff] %v1231
  %1361 = vst [vmem:[%s5 + $0x90] sm:$0xff] %v1232
  %1362 = vst.msk [vmem:[%s5 + $0x98] sm:$0xff] %vm1345, %v1233
  %1363 = vst [vmem:[%s5 + $0xa0] sm:$0xff] %v1234
  %1364 = vst [vmem:[%s5 + $0xa8] sm:$0xff] %v1235
  %1365 = vst [vmem:[%s5 + $0xb0] sm:$0xff] %v1236
  %1366 = vst.msk [vmem:[%s5 + $0xb8] sm:$0xff] %vm1345, %v1237
  %1367 = vst [vmem:[%s5 + $0xc0] sm:$0xff] %v1238
  %1368 = vst [vmem:[%s5 + $0xc8] sm:$0xff] %v1239
  %1369 = vst [vmem:[%s5 + $0xd0] sm:$0xff] %v1240
  %1370 = vst.msk [vmem:[%s5 + $0xd8] sm:$0xff] %vm1345, %v1241
  %1371 = vst [vmem:[%s5 + $0xe0] sm:$0xff] %v1242
  %1372 = vst [vmem:[%s5 + $0xe8] sm:$0xff] %v1243
  %1373 = vst [vmem:[%s5 + $0xf0] sm:$0xff] %v1244
  %1374 = vst.msk [vmem:[%s5 + $0xf8] sm:$0xff] %vm1345, %v1245
  %1375 = vst [vmem:[%s5 + $0x100] sm:$0xff] %v1246
  %1376 = vst [vmem:[%s5 + $0x108] sm:$0xff] %v1247
  %1377 = vst [vmem:[%s5 + $0x110] sm:$0xff] %v1248
  %1378 = vst.msk [vmem:[%s5 + $0x118] sm:$0xff] %vm1345, %v1249
  %1379 = vst [vmem:[%s5 + $0x120] sm:$0xff] %v1250
  %1380 = vst [vmem:[%s5 + $0x128] sm:$0xff] %v1251
  %1381 = vst [vmem:[%s5 + $0x130] sm:$0xff] %v1252
  %1382 = vst.msk [vmem:[%s5 + $0x138] sm:$0xff] %vm1345, %v1253
  %1383 = vst [vmem:[%s5 + $0x140] sm:$0xff] %v1254
  %1384 = vst [vmem:[%s5 + $0x148] sm:$0xff] %v1255
  %1385 = vst [vmem:[%s5 + $0x150] sm:$0xff] %v1256
  %1386 = vst.msk [vmem:[%s5 + $0x158] sm:$0xff] %vm1345, %v1257
  %1387 = vst [vmem:[%s5 + $0x160] sm:$0xff] %v1258
  %1388 = vst [vmem:[%s5 + $0x168] sm:$0xff] %v1259
  %1389 = vst [vmem:[%s5 + $0x170] sm:$0xff] %v1260
  %1390 = vst.msk [vmem:[%s5 + $0x178] sm:$0xff] %vm1345, %v1261
  %1391 = vst [vmem:[%s5 + $0x180] sm:$0xff] %v1262
  %1392 = vst [vmem:[%s5 + $0x188] sm:$0xff] %v1263
  %1393 = vst [vmem:[%s5 + $0x190] sm:$0xff] %v1264
  %1394 = vst.msk [vmem:[%s5 + $0x198] sm:$0xff] %vm1345, %v1265
  %1395 = vst [vmem:[%s5 + $0x1a0] sm:$0xff] %v1266
  %1396 = vst [vmem:[%s5 + $0x1a8] sm:$0xff] %v1267
  %1397 = vst [vmem:[%s5 + $0x1b0] sm:$0xff] %v1268
  %1398 = vst.msk [vmem:[%s5 + $0x1b8] sm:$0xff] %vm1345, %v1269
  %1399 = vst [vmem:[%s5 + $0x1c0] sm:$0xff] %v1270
  %1400 = vst [vmem:[%s5 + $0x1c8] sm:$0xff] %v1271
  %1401 = vst [vmem:[%s5 + $0x1d0] sm:$0xff] %v1272
  %1402 = vst.msk [vmem:[%s5 + $0x1d8] sm:$0xff] %vm1345, %v1273
  %1403 = vst [vmem:[%s5 + $0x1e0] sm:$0xff] %v1274
  %1404 = vst [vmem:[%s5 + $0x1e8] sm:$0xff] %v1275
  %1405 = vst [vmem:[%s5 + $0x1f0] sm:$0xff] %v1276
  %1406 = vst.msk [vmem:[%s5 + $0x1f8] sm:$0xff] %vm1345, %v1277
  %1407 = vst [vmem:[%s5 + $0x200] sm:$0xff] %v1278
  %1408 = vst [vmem:[%s5 + $0x208] sm:$0xff] %v1279
  %1409 = vst [vmem:[%s5 + $0x210] sm:$0xff] %v1280
  %1410 = vst.msk [vmem:[%s5 + $0x218] sm:$0xff] %vm1345, %v1281
  %1411 = vst [vmem:[%s5 + $0x220] sm:$0xff] %v1282
  %1412 = vst [vmem:[%s5 + $0x228] sm:$0xff] %v1283
  %1413 = vst [vmem:[%s5 + $0x230] sm:$0xff] %v1284
  %1414 = vst.msk [vmem:[%s5 + $0x238] sm:$0xff] %vm1345, %v1285
  %1415 = vst [vmem:[%s5 + $0x240] sm:$0xff] %v1286
  %1416 = vst [vmem:[%s5 + $0x248] sm:$0xff] %v1287
  %1417 = vst [vmem:[%s5 + $0x250] sm:$0xff] %v1288
  %1418 = vst.msk [vmem:[%s5 + $0x258] sm:$0xff] %vm1345, %v1289
  %1419 = vst [vmem:[%s5 + $0x260] sm:$0xff] %v1290
  %1420 = vst [vmem:[%s5 + $0x268] sm:$0xff] %v1291
  %1421 = vst [vmem:[%s5 + $0x270] sm:$0xff] %v1292
  %1422 = vst.msk [vmem:[%s5 + $0x278] sm:$0xff] %vm1345, %v1293
  %1423 = vst [vmem:[%s5 + $0x280] sm:$0xff] %v1294
  %1424 = vst [vmem:[%s5 + $0x288] sm:$0xff] %v1295
  %1425 = vst [vmem:[%s5 + $0x290] sm:$0xff] %v1296
  %1426 = vst.msk [vmem:[%s5 + $0x298] sm:$0xff] %vm1345, %v1297
  %1427 = vst [vmem:[%s5 + $0x2a0] sm:$0xff] %v1298
  %1428 = vst [vmem:[%s5 + $0x2a8] sm:$0xff] %v1299
  %1429 = vst [vmem:[%s5 + $0x2b0] sm:$0xff] %v1300
  %1430 = vst.msk [vmem:[%s5 + $0x2b8] sm:$0xff] %vm1345, %v1301
  %1431 = vst [vmem:[%s5 + $0x2c0] sm:$0xff] %v1302
  %1432 = vst [vmem:[%s5 + $0x2c8] sm:$0xff] %v1303
  %1433 = vst [vmem:[%s5 + $0x2d0] sm:$0xff] %v1304
  %1434 = vst.msk [vmem:[%s5 + $0x2d8] sm:$0xff] %vm1345, %v1305
  %1435 = vst [vmem:[%s5 + $0x2e0] sm:$0xff] %v1306
  %1436 = vst [vmem:[%s5 + $0x2e8] sm:$0xff] %v1307
  %1437 = vst [vmem:[%s5 + $0x2f0] sm:$0xff] %v1308
  %1438 = vst.msk [vmem:[%s5 + $0x2f8] sm:$0xff] %vm1345, %v1309
  %1439 = vst [vmem:[%s5 + $0x300] sm:$0xff] %v1310
  %1440 = vst [vmem:[%s5 + $0x308] sm:$0xff] %v1311
  %1441 = vst [vmem:[%s5 + $0x310] sm:$0xff] %v1312
  %1442 = vst.msk [vmem:[%s5 + $0x318] sm:$0xff] %vm1345, %v1313
  %1443 = vst [vmem:[%s5 + $0x320] sm:$0xff] %v1314
  %1444 = vst [vmem:[%s5 + $0x328] sm:$0xff] %v1315
  %1445 = vst [vmem:[%s5 + $0x330] sm:$0xff] %v1316
  %1446 = vst.msk [vmem:[%s5 + $0x338] sm:$0xff] %vm1345, %v1317
  %1447 = vst [vmem:[%s5 + $0x340] sm:$0xff] %v1318
  %1448 = vst [vmem:[%s5 + $0x348] sm:$0xff] %v1319
  %1449 = vst [vmem:[%s5 + $0x350] sm:$0xff] %v1320
  %1450 = vst.msk [vmem:[%s5 + $0x358] sm:$0xff] %vm1345, %v1321
  %1451 = vst [vmem:[%s5 + $0x360] sm:$0xff] %v1322
  %1452 = vst [vmem:[%s5 + $0x368] sm:$0xff] %v1323
  %1453 = vst [vmem:[%s5 + $0x370] sm:$0xff] %v1324
  %1454 = vst.msk [vmem:[%s5 + $0x378] sm:$0xff] %vm1345, %v1325
  %1455 = vst [vmem:[%s5 + $0x380] sm:$0xff] %v1326
  %1456 = vst [vmem:[%s5 + $0x388] sm:$0xff] %v1327
  %1457 = vst [vmem:[%s5 + $0x390] sm:$0xff] %v1328
  %1458 = vst.msk [vmem:[%s5 + $0x398] sm:$0xff] %vm1345, %v1329
  %1459 = vst [vmem:[%s5 + $0x3a0] sm:$0xff] %v1330
  %1460 = vst [vmem:[%s5 + $0x3a8] sm:$0xff] %v1331
  %1461 = vst [vmem:[%s5 + $0x3b0] sm:$0xff] %v1332
  %1462 = vst.msk [vmem:[%s5 + $0x3b8] sm:$0xff] %vm1345, %v1333
  %1463 = vst [vmem:[%s5 + $0x3c0] sm:$0xff] %v1334
  %1464 = vst [vmem:[%s5 + $0x3c8] sm:$0xff] %v1335
  %1465 = vst [vmem:[%s5 + $0x3d0] sm:$0xff] %v1336
  %1466 = vst.msk [vmem:[%s5 + $0x3d8] sm:$0xff] %vm1345, %v1337
  %1467 = vst [vmem:[%s5 + $0x3e0] sm:$0xff] %v1338
  %1468 = vst [vmem:[%s5 + $0x3e8] sm:$0xff] %v1339
  %1469 = vst [vmem:[%s5 + $0x3f0] sm:$0xff] %v1340
  %1470 = vst.msk [vmem:[%s5 + $0x3f8] sm:$0xff] %vm1345, %v1341
  // Predicated region
  $region22: #{ablated_pair_energies_forward.2} parent=0 // pred_check
    _
  $region23: #{ablated_pair_energies_forward.2} parent=0 // pred_check_branch
    %1472 = sbr.rel (0) target = $region25
  $region24: #{ablated_pair_energies_forward.2} parent=0 // pred_region
    _
  $region25: #{ablated_pair_energies_forward.2} parent=0 // pred_fallthru
    _
  // Predicated region
  $region26: #{ablated_pair_energies_forward.2} parent=0 // pred_check
    _
  $region27: #{ablated_pair_energies_forward.2} parent=0 // pred_check_branch
    %1474 = sbr.rel (0) target = $region29
  $region28: #{ablated_pair_energies_forward.2} parent=0 // pred_region
    _
  $region29: #{ablated_pair_energies_forward.2} parent=0 // pred_fallthru
    _

// kernel: ablated_pair_energies_forward.3
$region0: #{ablated_pair_energies_forward.3}
  #allocation0 [shape = 'u32[]', space=smem, size = 0x4, offset = 0x4, fixed_abs, tag = 'smem constant byte address 0x4 - core index']
  #allocation1 [shape = 'u32[72,128]{1,0:T(1,128)}', space=vmem, size = 0x9000, scoped, tag = 'internal scratch']
  %s0 = inlined_call_operand.vmem [shape: f32[256,400], index: 0, kind: input, shape index: {}, may-alias: {0,2}]
  %s1 = inlined_call_operand.vmem [shape: bf16[256,400], index: 1, kind: input, shape index: {}]
  %s2 = inlined_call_operand.vmem [shape: f32[256,400], index: 2, kind: output, shape index: {}, may-alias: {0,2}]
  %s3 = sld [smem:[#allocation0]]
  $region18: #{ablated_pair_energies_forward.3} parent=0
    _
  %s5 = ssub.s32 1, %s3
  %s6 = scalar_select 0, %s5, %s3
  // Predicated region
  $region2: #{ablated_pair_energies_forward.3} parent=0 // pred_check
    _
  $region3: #{ablated_pair_energies_forward.3} parent=0 // pred_check_branch
    %8 = sbr.rel (0) target = $region5
  $region4: #{ablated_pair_energies_forward.3} parent=0 // pred_region
    _
  $region5: #{ablated_pair_energies_forward.3} parent=0 // pred_fallthru
    _
  // Predicated region
  $region6: #{ablated_pair_energies_forward.3} parent=0 // pred_check
    _
  $region7: #{ablated_pair_energies_forward.3} parent=0 // pred_check_branch
    %10 = sbr.rel (0) target = $region9
  $region8: #{ablated_pair_energies_forward.3} parent=0 // pred_region
    _
  $region9: #{ablated_pair_energies_forward.3} parent=0 // pred_fallthru
    _
  %v11 = vld [vmem:[%s0] sm:$0xff]
  %v12 = vld [vmem:[%s0 + $0x8] sm:$0xff]
  %v13 = vld [vmem:[%s0 + $0x10] sm:$0xff]
  %v14 = vld [vmem:[%s0 + $0x18] sm:$0xff]
  %v15 = vld [vmem:[%s0 + $0x20] sm:$0xff]
  %v16 = vld [vmem:[%s0 + $0x28] sm:$0xff]
  %v17 = vld [vmem:[%s0 + $0x30] sm:$0xff]
  %v18 = vld [vmem:[%s0 + $0x38] sm:$0xff]
  %v19 = vld [vmem:[%s0 + $0x40] sm:$0xff]
  %v20 = vld [vmem:[%s0 + $0x48] sm:$0xff]
  %v21 = vld [vmem:[%s0 + $0x50] sm:$0xff]
  %v22 = vld [vmem:[%s0 + $0x58] sm:$0xff]
  %v23 = vld [vmem:[%s0 + $0x60] sm:$0xff]
  %v24 = vld [vmem:[%s0 + $0x68] sm:$0xff]
  %v25 = vld [vmem:[%s0 + $0x70] sm:$0xff]
  %v26 = vld [vmem:[%s0 + $0x78] sm:$0xff]
  %v27 = vld [vmem:[%s0 + $0x80] sm:$0xff]
  %v28 = vld [vmem:[%s0 + $0x88] sm:$0xff]
  %v29 = vld [vmem:[%s0 + $0x90] sm:$0xff]
  %v30 = vld [vmem:[%s0 + $0x98] sm:$0xff]
  %v31 = vld [vmem:[%s0 + $0xa0] sm:$0xff]
  %v32 = vld [vmem:[%s0 + $0xa8] sm:$0xff]
  %v33 = vld [vmem:[%s0 + $0xb0] sm:$0xff]
  %v34 = vld [vmem:[%s0 + $0xb8] sm:$0xff]
  %v35 = vld [vmem:[%s0 + $0xc0] sm:$0xff]
  %v36 = vld [vmem:[%s0 + $0xc8] sm:$0xff]
  %v37 = vld [vmem:[%s0 + $0xd0] sm:$0xff]
  %v38 = vld [vmem:[%s0 + $0xd8] sm:$0xff]
  %v39 = vld [vmem:[%s0 + $0xe0] sm:$0xff]
  %v40 = vld [vmem:[%s0 + $0xe8] sm:$0xff]
  %v41 = vld [vmem:[%s0 + $0xf0] sm:$0xff]
  %v42 = vld [vmem:[%s0 + $0xf8] sm:$0xff]
  %v43 = vld [vmem:[%s0 + $0x100] sm:$0xff]
  %v44 = vld [vmem:[%s0 + $0x108] sm:$0xff]
  %v45 = vld [vmem:[%s0 + $0x110] sm:$0xff]
  %v46 = vld [vmem:[%s0 + $0x118] sm:$0xff]
  %v47 = vld [vmem:[%s0 + $0x120] sm:$0xff]
  %v48 = vld [vmem:[%s0 + $0x128] sm:$0xff]
  %v49 = vld [vmem:[%s0 + $0x130] sm:$0xff]
  %v50 = vld [vmem:[%s0 + $0x138] sm:$0xff]
  %v51 = vld [vmem:[%s0 + $0x140] sm:$0xff]
  %v52 = vld [vmem:[%s0 + $0x148] sm:$0xff]
  %v53 = vld [vmem:[%s0 + $0x150] sm:$0xff]
  %v54 = vld [vmem:[%s0 + $0x158] sm:$0xff]
  %v55 = vld [vmem:[%s0 + $0x160] sm:$0xff]
  %v56 = vld [vmem:[%s0 + $0x168] sm:$0xff]
  %v57 = vld [vmem:[%s0 + $0x170] sm:$0xff]
  %v58 = vld [vmem:[%s0 + $0x178] sm:$0xff]
  %v59 = vld [vmem:[%s0 + $0x180] sm:$0xff]
  %v60 = vld [vmem:[%s0 + $0x188] sm:$0xff]
  %v61 = vld [vmem:[%s0 + $0x190] sm:$0xff]
  %v62 = vld [vmem:[%s0 + $0x198] sm:$0xff]
  %v63 = vld [vmem:[%s0 + $0x1a0] sm:$0xff]
  %v64 = vld [vmem:[%s0 + $0x1a8] sm:$0xff]
  %v65 = vld [vmem:[%s0 + $0x1b0] sm:$0xff]
  %v66 = vld [vmem:[%s0 + $0x1b8] sm:$0xff]
  %v67 = vld [vmem:[%s0 + $0x1c0] sm:$0xff]
  %v68 = vld [vmem:[%s0 + $0x1c8] sm:$0xff]
  %v69 = vld [vmem:[%s0 + $0x1d0] sm:$0xff]
  %v70 = vld [vmem:[%s0 + $0x1d8] sm:$0xff]
  %v71 = vld [vmem:[%s0 + $0x1e0] sm:$0xff]
  %v72 = vld [vmem:[%s0 + $0x1e8] sm:$0xff]
  %v73 = vld [vmem:[%s0 + $0x1f0] sm:$0xff]
  %v74 = vld [vmem:[%s0 + $0x1f8] sm:$0xff]
  %v75 = vld [vmem:[%s0 + $0x200] sm:$0xff]
  %v76 = vld [vmem:[%s0 + $0x208] sm:$0xff]
  %v77 = vld [vmem:[%s0 + $0x210] sm:$0xff]
  %v78 = vld [vmem:[%s0 + $0x218] sm:$0xff]
  %v79 = vld [vmem:[%s0 + $0x220] sm:$0xff]
  %v80 = vld [vmem:[%s0 + $0x228] sm:$0xff]
  %v81 = vld [vmem:[%s0 + $0x230] sm:$0xff]
  %v82 = vld [vmem:[%s0 + $0x238] sm:$0xff]
  %v83 = vld [vmem:[%s0 + $0x240] sm:$0xff]
  %v84 = vld [vmem:[%s0 + $0x248] sm:$0xff]
  %v85 = vld [vmem:[%s0 + $0x250] sm:$0xff]
  %v86 = vld [vmem:[%s0 + $0x258] sm:$0xff]
  %v87 = vld [vmem:[%s0 + $0x260] sm:$0xff]
  %v88 = vld [vmem:[%s0 + $0x268] sm:$0xff]
  %v89 = vld [vmem:[%s0 + $0x270] sm:$0xff]
  %v90 = vld [vmem:[%s0 + $0x278] sm:$0xff]
  %v91 = vld [vmem:[%s0 + $0x280] sm:$0xff]
  %v92 = vld [vmem:[%s0 + $0x288] sm:$0xff]
  %v93 = vld [vmem:[%s0 + $0x290] sm:$0xff]
  %v94 = vld [vmem:[%s0 + $0x298] sm:$0xff]
  %v95 = vld [vmem:[%s0 + $0x2a0] sm:$0xff]
  %v96 = vld [vmem:[%s0 + $0x2a8] sm:$0xff]
  %v97 = vld [vmem:[%s0 + $0x2b0] sm:$0xff]
  %v98 = vld [vmem:[%s0 + $0x2b8] sm:$0xff]
  %v99 = vld [vmem:[%s0 + $0x2c0] sm:$0xff]
  %v100 = vld [vmem:[%s0 + $0x2c8] sm:$0xff]
  %v101 = vld [vmem:[%s0 + $0x2d0] sm:$0xff]
  %v102 = vld [vmem:[%s0 + $0x2d8] sm:$0xff]
  %v103 = vld [vmem:[%s0 + $0x2e0] sm:$0xff]
  %v104 = vld [vmem:[%s0 + $0x2e8] sm:$0xff]
  %v105 = vld [vmem:[%s0 + $0x2f0] sm:$0xff]
  %v106 = vld [vmem:[%s0 + $0x2f8] sm:$0xff]
  %v107 = vld [vmem:[%s0 + $0x300] sm:$0xff]
  %v108 = vld [vmem:[%s0 + $0x308] sm:$0xff]
  %v109 = vld [vmem:[%s0 + $0x310] sm:$0xff]
  %v110 = vld [vmem:[%s0 + $0x318] sm:$0xff]
  %v111 = vld [vmem:[%s0 + $0x320] sm:$0xff]
  %v112 = vld [vmem:[%s0 + $0x328] sm:$0xff]
  %v113 = vld [vmem:[%s0 + $0x330] sm:$0xff]
  %v114 = vld [vmem:[%s0 + $0x338] sm:$0xff]
  %v115 = vld [vmem:[%s0 + $0x340] sm:$0xff]
  %v116 = vld [vmem:[%s0 + $0x348] sm:$0xff]
  %v117 = vld [vmem:[%s0 + $0x350] sm:$0xff]
  %v118 = vld [vmem:[%s0 + $0x358] sm:$0xff]
  %v119 = vld [vmem:[%s0 + $0x360] sm:$0xff]
  %v120 = vld [vmem:[%s0 + $0x368] sm:$0xff]
  %v121 = vld [vmem:[%s0 + $0x370] sm:$0xff]
  %v122 = vld [vmem:[%s0 + $0x378] sm:$0xff]
  %v123 = vld [vmem:[%s0 + $0x380] sm:$0xff]
  %v124 = vld [vmem:[%s0 + $0x388] sm:$0xff]
  %v125 = vld [vmem:[%s0 + $0x390] sm:$0xff]
  %v126 = vld [vmem:[%s0 + $0x398] sm:$0xff]
  %v127 = vld [vmem:[%s0 + $0x3a0] sm:$0xff]
  %v128 = vld [vmem:[%s0 + $0x3a8] sm:$0xff]
  %v129 = vld [vmem:[%s0 + $0x3b0] sm:$0xff]
  %v130 = vld [vmem:[%s0 + $0x3b8] sm:$0xff]
  %v131 = vld [vmem:[%s0 + $0x3c0] sm:$0xff]
  %v132 = vld [vmem:[%s0 + $0x3c8] sm:$0xff]
  %v133 = vld [vmem:[%s0 + $0x3d0] sm:$0xff]
  %v134 = vld [vmem:[%s0 + $0x3d8] sm:$0xff]
  %v135 = vld [vmem:[%s0 + $0x3e0] sm:$0xff]
  %v136 = vld [vmem:[%s0 + $0x3e8] sm:$0xff]
  %v137 = vld [vmem:[%s0 + $0x3f0] sm:$0xff]
  %v138 = vld [vmem:[%s0 + $0x3f8] sm:$0xff]
  %v139 = vld [vmem:[%s1] sm:$0xff]
  %v140 = vld [vmem:[%s1 + $0x8] sm:$0xff]
  %v141 = vld [vmem:[%s1 + $0x10] sm:$0xff]
  %v142 = vld [vmem:[%s1 + $0x18] sm:$0xff]
  %v143 = vld [vmem:[%s1 + $0x20] sm:$0xff]
  %v144 = vld [vmem:[%s1 + $0x28] sm:$0xff]
  %v145 = vld [vmem:[%s1 + $0x30] sm:$0xff]
  %v146 = vld [vmem:[%s1 + $0x38] sm:$0xff]
  %v147 = vld [vmem:[%s1 + $0x40] sm:$0xff]
  %v148 = vld [vmem:[%s1 + $0x48] sm:$0xff]
  %v149 = vld [vmem:[%s1 + $0x50] sm:$0xff]
  %v150 = vld [vmem:[%s1 + $0x58] sm:$0xff]
  %v151 = vld [vmem:[%s1 + $0x60] sm:$0xff]
  %v152 = vld [vmem:[%s1 + $0x68] sm:$0xff]
  %v153 = vld [vmem:[%s1 + $0x70] sm:$0xff]
  %v154 = vld [vmem:[%s1 + $0x78] sm:$0xff]
  %v155 = vld [vmem:[%s1 + $0x80] sm:$0xff]
  %v156 = vld [vmem:[%s1 + $0x88] sm:$0xff]
  %v157 = vld [vmem:[%s1 + $0x90] sm:$0xff]
  %v158 = vld [vmem:[%s1 + $0x98] sm:$0xff]
  %v159 = vld [vmem:[%s1 + $0xa0] sm:$0xff]
  %v160 = vld [vmem:[%s1 + $0xa8] sm:$0xff]
  %v161 = vld [vmem:[%s1 + $0xb0] sm:$0xff]
  %v162 = vld [vmem:[%s1 + $0xb8] sm:$0xff]
  %v163 = vld [vmem:[%s1 + $0xc0] sm:$0xff]
  %v164 = vld [vmem:[%s1 + $0xc8] sm:$0xff]
  %v165 = vld [vmem:[%s1 + $0xd0] sm:$0xff]
  %v166 = vld [vmem:[%s1 + $0xd8] sm:$0xff]
  %v167 = vld [vmem:[%s1 + $0xe0] sm:$0xff]
  %v168 = vld [vmem:[%s1 + $0xe8] sm:$0xff]
  %v169 = vld [vmem:[%s1 + $0xf0] sm:$0xff]
  %v170 = vld [vmem:[%s1 + $0xf8] sm:$0xff]
  %v171 = vld [vmem:[%s1 + $0x100] sm:$0xff]
  %v172 = vld [vmem:[%s1 + $0x108] sm:$0xff]
  %v173 = vld [vmem:[%s1 + $0x110] sm:$0xff]
  %v174 = vld [vmem:[%s1 + $0x118] sm:$0xff]
  %v175 = vld [vmem:[%s1 + $0x120] sm:$0xff]
  %v176 = vld [vmem:[%s1 + $0x128] sm:$0xff]
  %v177 = vld [vmem:[%s1 + $0x130] sm:$0xff]
  %v178 = vld [vmem:[%s1 + $0x138] sm:$0xff]
  %v179 = vld [vmem:[%s1 + $0x140] sm:$0xff]
  %v180 = vld [vmem:[%s1 + $0x148] sm:$0xff]
  %v181 = vld [vmem:[%s1 + $0x150] sm:$0xff]
  %v182 = vld [vmem:[%s1 + $0x158] sm:$0xff]
  %v183 = vld [vmem:[%s1 + $0x160] sm:$0xff]
  %v184 = vld [vmem:[%s1 + $0x168] sm:$0xff]
  %v185 = vld [vmem:[%s1 + $0x170] sm:$0xff]
  %v186 = vld [vmem:[%s1 + $0x178] sm:$0xff]
  %v187 = vld [vmem:[%s1 + $0x180] sm:$0xff]
  %v188 = vld [vmem:[%s1 + $0x188] sm:$0xff]
  %v189 = vld [vmem:[%s1 + $0x190] sm:$0xff]
  %v190 = vld [vmem:[%s1 + $0x198] sm:$0xff]
  %v191 = vld [vmem:[%s1 + $0x1a0] sm:$0xff]
  %v192 = vld [vmem:[%s1 + $0x1a8] sm:$0xff]
  %v193 = vld [vmem:[%s1 + $0x1b0] sm:$0xff]
  %v194 = vld [vmem:[%s1 + $0x1b8] sm:$0xff]
  %v195 = vld [vmem:[%s1 + $0x1c0] sm:$0xff]
  %v196 = vld [vmem:[%s1 + $0x1c8] sm:$0xff]
  %v197 = vld [vmem:[%s1 + $0x1d0] sm:$0xff]
  %v198 = vld [vmem:[%s1 + $0x1d8] sm:$0xff]
  %v199 = vld [vmem:[%s1 + $0x1e0] sm:$0xff]
  %v200 = vld [vmem:[%s1 + $0x1e8] sm:$0xff]
  %v201 = vld [vmem:[%s1 + $0x1f0] sm:$0xff]
  %v202 = vld [vmem:[%s1 + $0x1f8] sm:$0xff]
  %v203 = vunpack.c.l.bf16 %v139
  %v204 = vunpack.c.h.bf16 %v139
  %v205 = vunpack.c.l.bf16 %v140
  %v206 = vunpack.c.h.bf16 %v140
  %v207 = vunpack.c.l.bf16 %v141
  %v208 = vunpack.c.h.bf16 %v141
  %v209 = vunpack.c.l.bf16 %v142
  %v210 = vunpack.c.h.bf16 %v142
  %v211 = vunpack.c.l.bf16 %v143
  %v212 = vunpack.c.h.bf16 %v143
  %v213 = vunpack.c.l.bf16 %v144
  %v214 = vunpack.c.h.bf16 %v144
  %v215 = vunpack.c.l.bf16 %v145
  %v216 = vunpack.c.h.bf16 %v145
  %v217 = vunpack.c.l.bf16 %v146
  %v218 = vunpack.c.h.bf16 %v146
  %v219 = vunpack.c.l.bf16 %v147
  %v220 = vunpack.c.h.bf16 %v147
  %v221 = vunpack.c.l.bf16 %v148
  %v222 = vunpack.c.h.bf16 %v148
  %v223 = vunpack.c.l.bf16 %v149
  %v224 = vunpack.c.h.bf16 %v149
  %v225 = vunpack.c.l.bf16 %v150
  %v226 = vunpack.c.h.bf16 %v150
  %v227 = vunpack.c.l.bf16 %v151
  %v228 = vunpack.c.h.bf16 %v151
  %v229 = vunpack.c.l.bf16 %v152
  %v230 = vunpack.c.h.bf16 %v152
  %v231 = vunpack.c.l.bf16 %v153
  %v232 = vunpack.c.h.bf16 %v153
  %v233 = vunpack.c.l.bf16 %v154
  %v234 = vunpack.c.h.bf16 %v154
  %v235 = vunpack.c.l.bf16 %v155
  %v236 = vunpack.c.h.bf16 %v155
  %v237 = vunpack.c.l.bf16 %v156
  %v238 = vunpack.c.h.bf16 %v156
  %v239 = vunpack.c.l.bf16 %v157
  %v240 = vunpack.c.h.bf16 %v157
  %v241 = vunpack.c.l.bf16 %v158
  %v242 = vunpack.c.h.bf16 %v158
  %v243 = vunpack.c.l.bf16 %v159
  %v244 = vunpack.c.h.bf16 %v159
  %v245 = vunpack.c.l.bf16 %v160
  %v246 = vunpack.c.h.bf16 %v160
  %v247 = vunpack.c.l.bf16 %v161
  %v248 = vunpack.c.h.bf16 %v161
  %v249 = vunpack.c.l.bf16 %v162
  %v250 = vunpack.c.h.bf16 %v162
  %v251 = vunpack.c.l.bf16 %v163
  %v252 = vunpack.c.h.bf16 %v163
  %v253 = vunpack.c.l.bf16 %v164
  %v254 = vunpack.c.h.bf16 %v164
  %v255 = vunpack.c.l.bf16 %v165
  %v256 = vunpack.c.h.bf16 %v165
  %v257 = vunpack.c.l.bf16 %v166
  %v258 = vunpack.c.h.bf16 %v166
  %v259 = vunpack.c.l.bf16 %v167
  %v260 = vunpack.c.h.bf16 %v167
  %v261 = vunpack.c.l.bf16 %v168
  %v262 = vunpack.c.h.bf16 %v168
  %v263 = vunpack.c.l.bf16 %v169
  %v264 = vunpack.c.h.bf16 %v169
  %v265 = vunpack.c.l.bf16 %v170
  %v266 = vunpack.c.h.bf16 %v170
  %v267 = vunpack.c.l.bf16 %v171
  %v268 = vunpack.c.h.bf16 %v171
  %v269 = vunpack.c.l.bf16 %v172
  %v270 = vunpack.c.h.bf16 %v172
  %v271 = vunpack.c.l.bf16 %v173
  %v272 = vunpack.c.h.bf16 %v173
  %v273 = vunpack.c.l.bf16 %v174
  %v274 = vunpack.c.h.bf16 %v174
  %v275 = vunpack.c.l.bf16 %v175
  %v276 = vunpack.c.h.bf16 %v175
  %v277 = vunpack.c.l.bf16 %v176
  %v278 = vunpack.c.h.bf16 %v176
  %v279 = vunpack.c.l.bf16 %v177
  %v280 = vunpack.c.h.bf16 %v177
  %v281 = vunpack.c.l.bf16 %v178
  %v282 = vunpack.c.h.bf16 %v178
  %v283 = vunpack.c.l.bf16 %v179
  %v284 = vunpack.c.h.bf16 %v179
  %v285 = vunpack.c.l.bf16 %v180
  %v286 = vunpack.c.h.bf16 %v180
  %v287 = vunpack.c.l.bf16 %v181
  %v288 = vunpack.c.h.bf16 %v181
  %v289 = vunpack.c.l.bf16 %v182
  %v290 = vunpack.c.h.bf16 %v182
  %v291 = vunpack.c.l.bf16 %v183
  %v292 = vunpack.c.h.bf16 %v183
  %v293 = vunpack.c.l.bf16 %v184
  %v294 = vunpack.c.h.bf16 %v184
  %v295 = vunpack.c.l.bf16 %v185
  %v296 = vunpack.c.h.bf16 %v185
  %v297 = vunpack.c.l.bf16 %v186
  %v298 = vunpack.c.h.bf16 %v186
  %v299 = vunpack.c.l.bf16 %v187
  %v300 = vunpack.c.h.bf16 %v187
  %v301 = vunpack.c.l.bf16 %v188
  %v302 = vunpack.c.h.bf16 %v188
  %v303 = vunpack.c.l.bf16 %v189
  %v304 = vunpack.c.h.bf16 %v189
  %v305 = vunpack.c.l.bf16 %v190
  %v306 = vunpack.c.h.bf16 %v190
  %v307 = vunpack.c.l.bf16 %v191
  %v308 = vunpack.c.h.bf16 %v191
  %v309 = vunpack.c.l.bf16 %v192
  %v310 = vunpack.c.h.bf16 %v192
  %v311 = vunpack.c.l.bf16 %v193
  %v312 = vunpack.c.h.bf16 %v193
  %v313 = vunpack.c.l.bf16 %v194
  %v314 = vunpack.c.h.bf16 %v194
  %v315 = vunpack.c.l.bf16 %v195
  %v316 = vunpack.c.h.bf16 %v195
  %v317 = vunpack.c.l.bf16 %v196
  %v318 = vunpack.c.h.bf16 %v196
  %v319 = vunpack.c.l.bf16 %v197
  %v320 = vunpack.c.h.bf16 %v197
  %v321 = vunpack.c.l.bf16 %v198
  %v322 = vunpack.c.h.bf16 %v198
  %v323 = vunpack.c.l.bf16 %v199
  %v324 = vunpack.c.h.bf16 %v199
  %v325 = vunpack.c.l.bf16 %v200
  %v326 = vunpack.c.h.bf16 %v200
  %v327 = vunpack.c.l.bf16 %v201
  %v328 = vunpack.c.h.bf16 %v201
  %v329 = vunpack.c.l.bf16 %v202
  %v330 = vunpack.c.h.bf16 %v202
  %vm331 = vcmp.ne.f32.partialorder %v203, 0.0
  %vm332 = vcmp.ne.f32.partialorder %v204, 0.0
  %vm333 = vcmp.ne.f32.partialorder %v205, 0.0
  %vm334 = vcmp.ne.f32.partialorder %v206, 0.0
  %vm335 = vcmp.ne.f32.partialorder %v207, 0.0
  %vm336 = vcmp.ne.f32.partialorder %v208, 0.0
  %vm337 = vcmp.ne.f32.partialorder %v209, 0.0
  %vm338 = vcmp.ne.f32.partialorder %v210, 0.0
  %vm339 = vcmp.ne.f32.partialorder %v211, 0.0
  %vm340 = vcmp.ne.f32.partialorder %v212, 0.0
  %vm341 = vcmp.ne.f32.partialorder %v213, 0.0
  %vm342 = vcmp.ne.f32.partialorder %v214, 0.0
  %vm343 = vcmp.ne.f32.partialorder %v215, 0.0
  %vm344 = vcmp.ne.f32.partialorder %v216, 0.0
  %vm345 = vcmp.ne.f32.partialorder %v217, 0.0
  %vm346 = vcmp.ne.f32.partialorder %v218, 0.0
  %vm347 = vcmp.ne.f32.partialorder %v219, 0.0
  %vm348 = vcmp.ne.f32.partialorder %v220, 0.0
  %vm349 = vcmp.ne.f32.partialorder %v221, 0.0
  %vm350 = vcmp.ne.f32.partialorder %v222, 0.0
  %vm351 = vcmp.ne.f32.partialorder %v223, 0.0
  %vm352 = vcmp.ne.f32.partialorder %v224, 0.0
  %vm353 = vcmp.ne.f32.partialorder %v225, 0.0
  %vm354 = vcmp.ne.f32.partialorder %v226, 0.0
  %vm355 = vcmp.ne.f32.partialorder %v227, 0.0
  %vm356 = vcmp.ne.f32.partialorder %v228, 0.0
  %vm357 = vcmp.ne.f32.partialorder %v229, 0.0
  %vm358 = vcmp.ne.f32.partialorder %v230, 0.0
  %vm359 = vcmp.ne.f32.partialorder %v231, 0.0
  %vm360 = vcmp.ne.f32.partialorder %v232, 0.0
  %vm361 = vcmp.ne.f32.partialorder %v233, 0.0
  %vm362 = vcmp.ne.f32.partialorder %v234, 0.0
  %vm363 = vcmp.ne.f32.partialorder %v235, 0.0
  %vm364 = vcmp.ne.f32.partialorder %v236, 0.0
  %vm365 = vcmp.ne.f32.partialorder %v237, 0.0
  %vm366 = vcmp.ne.f32.partialorder %v238, 0.0
  %vm367 = vcmp.ne.f32.partialorder %v239, 0.0
  %vm368 = vcmp.ne.f32.partialorder %v240, 0.0
  %vm369 = vcmp.ne.f32.partialorder %v241, 0.0
  %vm370 = vcmp.ne.f32.partialorder %v242, 0.0
  %vm371 = vcmp.ne.f32.partialorder %v243, 0.0
  %vm372 = vcmp.ne.f32.partialorder %v244, 0.0
  %vm373 = vcmp.ne.f32.partialorder %v245, 0.0
  %vm374 = vcmp.ne.f32.partialorder %v246, 0.0
  %vm375 = vcmp.ne.f32.partialorder %v247, 0.0
  %vm376 = vcmp.ne.f32.partialorder %v248, 0.0
  %vm377 = vcmp.ne.f32.partialorder %v249, 0.0
  %vm378 = vcmp.ne.f32.partialorder %v250, 0.0
  %vm379 = vcmp.ne.f32.partialorder %v251, 0.0
  %vm380 = vcmp.ne.f32.partialorder %v252, 0.0
  %vm381 = vcmp.ne.f32.partialorder %v253, 0.0
  %vm382 = vcmp.ne.f32.partialorder %v254, 0.0
  %vm383 = vcmp.ne.f32.partialorder %v255, 0.0
  %vm384 = vcmp.ne.f32.partialorder %v256, 0.0
  %vm385 = vcmp.ne.f32.partialorder %v257, 0.0
  %vm386 = vcmp.ne.f32.partialorder %v258, 0.0
  %vm387 = vcmp.ne.f32.partialorder %v259, 0.0
  %vm388 = vcmp.ne.f32.partialorder %v260, 0.0
  %vm389 = vcmp.ne.f32.partialorder %v261, 0.0
  %vm390 = vcmp.ne.f32.partialorder %v262, 0.0
  %vm391 = vcmp.ne.f32.partialorder %v263, 0.0
  %vm392 = vcmp.ne.f32.partialorder %v264, 0.0
  %vm393 = vcmp.ne.f32.partialorder %v265, 0.0
  %vm394 = vcmp.ne.f32.partialorder %v266, 0.0
  %vm395 = vcmp.ne.f32.partialorder %v267, 0.0
  %vm396 = vcmp.ne.f32.partialorder %v268, 0.0
  %vm397 = vcmp.ne.f32.partialorder %v269, 0.0
  %vm398 = vcmp.ne.f32.partialorder %v270, 0.0
  %vm399 = vcmp.ne.f32.partialorder %v271, 0.0
  %vm400 = vcmp.ne.f32.partialorder %v272, 0.0
  %vm401 = vcmp.ne.f32.partialorder %v273, 0.0
  %vm402 = vcmp.ne.f32.partialorder %v274, 0.0
  %vm403 = vcmp.ne.f32.partialorder %v275, 0.0
  %vm404 = vcmp.ne.f32.partialorder %v276, 0.0
  %vm405 = vcmp.ne.f32.partialorder %v277, 0.0
  %vm406 = vcmp.ne.f32.partialorder %v278, 0.0
  %vm407 = vcmp.ne.f32.partialorder %v279, 0.0
  %vm408 = vcmp.ne.f32.partialorder %v280, 0.0
  %vm409 = vcmp.ne.f32.partialorder %v281, 0.0
  %vm410 = vcmp.ne.f32.partialorder %v282, 0.0
  %vm411 = vcmp.ne.f32.partialorder %v283, 0.0
  %vm412 = vcmp.ne.f32.partialorder %v284, 0.0
  %vm413 = vcmp.ne.f32.partialorder %v285, 0.0
  %vm414 = vcmp.ne.f32.partialorder %v286, 0.0
  %vm415 = vcmp.ne.f32.partialorder %v287, 0.0
  %vm416 = vcmp.ne.f32.partialorder %v288, 0.0
  %vm417 = vcmp.ne.f32.partialorder %v289, 0.0
  %vm418 = vcmp.ne.f32.partialorder %v290, 0.0
  %vm419 = vcmp.ne.f32.partialorder %v291, 0.0
  %vm420 = vcmp.ne.f32.partialorder %v292, 0.0
  %vm421 = vcmp.ne.f32.partialorder %v293, 0.0
  %vm422 = vcmp.ne.f32.partialorder %v294, 0.0
  %vm423 = vcmp.ne.f32.partialorder %v295, 0.0
  %vm424 = vcmp.ne.f32.partialorder %v296, 0.0
  %vm425 = vcmp.ne.f32.partialorder %v297, 0.0
  %vm426 = vcmp.ne.f32.partialorder %v298, 0.0
  %vm427 = vcmp.ne.f32.partialorder %v299, 0.0
  %vm428 = vcmp.ne.f32.partialorder %v300, 0.0
  %vm429 = vcmp.ne.f32.partialorder %v301, 0.0
  %vm430 = vcmp.ne.f32.partialorder %v302, 0.0
  %vm431 = vcmp.ne.f32.partialorder %v303, 0.0
  %vm432 = vcmp.ne.f32.partialorder %v304, 0.0
  %vm433 = vcmp.ne.f32.partialorder %v305, 0.0
  %vm434 = vcmp.ne.f32.partialorder %v306, 0.0
  %vm435 = vcmp.ne.f32.partialorder %v307, 0.0
  %vm436 = vcmp.ne.f32.partialorder %v308, 0.0
  %vm437 = vcmp.ne.f32.partialorder %v309, 0.0
  %vm438 = vcmp.ne.f32.partialorder %v310, 0.0
  %vm439 = vcmp.ne.f32.partialorder %v311, 0.0
  %vm440 = vcmp.ne.f32.partialorder %v312, 0.0
  %vm441 = vcmp.ne.f32.partialorder %v313, 0.0
  %vm442 = vcmp.ne.f32.partialorder %v314, 0.0
  %vm443 = vcmp.ne.f32.partialorder %v315, 0.0
  %vm444 = vcmp.ne.f32.partialorder %v316, 0.0
  %vm445 = vcmp.ne.f32.partialorder %v317, 0.0
  %vm446 = vcmp.ne.f32.partialorder %v318, 0.0
  %vm447 = vcmp.ne.f32.partialorder %v319, 0.0
  %vm448 = vcmp.ne.f32.partialorder %v320, 0.0
  %vm449 = vcmp.ne.f32.partialorder %v321, 0.0
  %vm450 = vcmp.ne.f32.partialorder %v322, 0.0
  %vm451 = vcmp.ne.f32.partialorder %v323, 0.0
  %vm452 = vcmp.ne.f32.partialorder %v324, 0.0
  %vm453 = vcmp.ne.f32.partialorder %v325, 0.0
  %vm454 = vcmp.ne.f32.partialorder %v326, 0.0
  %vm455 = vcmp.ne.f32.partialorder %v327, 0.0
  %vm456 = vcmp.ne.f32.partialorder %v328, 0.0
  %vm457 = vcmp.ne.f32.partialorder %v329, 0.0
  %vm458 = vcmp.ne.f32.partialorder %v330, 0.0
  %v459 = vadd.f32 %v11, %v203
  %v460 = vadd.f32 %v12, %v204
  %v461 = vadd.f32 %v13, %v205
  %v462 = vadd.f32 %v14, %v206
  %v463 = vadd.f32 %v15, %v207
  %v464 = vadd.f32 %v16, %v208
  %v465 = vadd.f32 %v17, %v209
  %v466 = vadd.f32 %v18, %v210
  %v467 = vadd.f32 %v19, %v211
  %v468 = vadd.f32 %v20, %v212
  %v469 = vadd.f32 %v21, %v213
  %v470 = vadd.f32 %v22, %v214
  %v471 = vadd.f32 %v23, %v215
  %v472 = vadd.f32 %v24, %v216
  %v473 = vadd.f32 %v25, %v217
  %v474 = vadd.f32 %v26, %v218
  %v475 = vadd.f32 %v27, %v219
  %v476 = vadd.f32 %v28, %v220
  %v477 = vadd.f32 %v29, %v221
  %v478 = vadd.f32 %v30, %v222
  %v479 = vadd.f32 %v31, %v223
  %v480 = vadd.f32 %v32, %v224
  %v481 = vadd.f32 %v33, %v225
  %v482 = vadd.f32 %v34, %v226
  %v483 = vadd.f32 %v35, %v227
  %v484 = vadd.f32 %v36, %v228
  %v485 = vadd.f32 %v37, %v229
  %v486 = vadd.f32 %v38, %v230
  %v487 = vadd.f32 %v39, %v231
  %v488 = vadd.f32 %v40, %v232
  %v489 = vadd.f32 %v41, %v233
  %v490 = vadd.f32 %v42, %v234
  %v491 = vadd.f32 %v43, %v235
  %v492 = vadd.f32 %v44, %v236
  %v493 = vadd.f32 %v45, %v237
  %v494 = vadd.f32 %v46, %v238
  %v495 = vadd.f32 %v47, %v239
  %v496 = vadd.f32 %v48, %v240
  %v497 = vadd.f32 %v49, %v241
  %v498 = vadd.f32 %v50, %v242
  %v499 = vadd.f32 %v51, %v243
  %v500 = vadd.f32 %v52, %v244
  %v501 = vadd.f32 %v53, %v245
  %v502 = vadd.f32 %v54, %v246
  %v503 = vadd.f32 %v55, %v247
  %v504 = vadd.f32 %v56, %v248
  %v505 = vadd.f32 %v57, %v249
  %v506 = vadd.f32 %v58, %v250
  %v507 = vadd.f32 %v59, %v251
  %v508 = vadd.f32 %v60, %v252
  %v509 = vadd.f32 %v61, %v253
  %v510 = vadd.f32 %v62, %v254
  %v511 = vadd.f32 %v63, %v255
  %v512 = vadd.f32 %v64, %v256
  %v513 = vadd.f32 %v65, %v257
  %v514 = vadd.f32 %v66, %v258
  %v515 = vadd.f32 %v67, %v259
  %v516 = vadd.f32 %v68, %v260
  %v517 = vadd.f32 %v69, %v261
  %v518 = vadd.f32 %v70, %v262
  %v519 = vadd.f32 %v71, %v263
  %v520 = vadd.f32 %v72, %v264
  %v521 = vadd.f32 %v73, %v265
  %v522 = vadd.f32 %v74, %v266
  %v523 = vadd.f32 %v75, %v267
  %v524 = vadd.f32 %v76, %v268
  %v525 = vadd.f32 %v77, %v269
  %v526 = vadd.f32 %v78, %v270
  %v527 = vadd.f32 %v79, %v271
  %v528 = vadd.f32 %v80, %v272
  %v529 = vadd.f32 %v81, %v273
  %v530 = vadd.f32 %v82, %v274
  %v531 = vadd.f32 %v83, %v275
  %v532 = vadd.f32 %v84, %v276
  %v533 = vadd.f32 %v85, %v277
  %v534 = vadd.f32 %v86, %v278
  %v535 = vadd.f32 %v87, %v279
  %v536 = vadd.f32 %v88, %v280
  %v537 = vadd.f32 %v89, %v281
  %v538 = vadd.f32 %v90, %v282
  %v539 = vadd.f32 %v91, %v283
  %v540 = vadd.f32 %v92, %v284
  %v541 = vadd.f32 %v93, %v285
  %v542 = vadd.f32 %v94, %v286
  %v543 = vadd.f32 %v95, %v287
  %v544 = vadd.f32 %v96, %v288
  %v545 = vadd.f32 %v97, %v289
  %v546 = vadd.f32 %v98, %v290
  %v547 = vadd.f32 %v99, %v291
  %v548 = vadd.f32 %v100, %v292
  %v549 = vadd.f32 %v101, %v293
  %v550 = vadd.f32 %v102, %v294
  %v551 = vadd.f32 %v103, %v295
  %v552 = vadd.f32 %v104, %v296
  %v553 = vadd.f32 %v105, %v297
  %v554 = vadd.f32 %v106, %v298
  %v555 = vadd.f32 %v107, %v299
  %v556 = vadd.f32 %v108, %v300
  %v557 = vadd.f32 %v109, %v301
  %v558 = vadd.f32 %v110, %v302
  %v559 = vadd.f32 %v111, %v303
  %v560 = vadd.f32 %v112, %v304
  %v561 = vadd.f32 %v113, %v305
  %v562 = vadd.f32 %v114, %v306
  %v563 = vadd.f32 %v115, %v307
  %v564 = vadd.f32 %v116, %v308
  %v565 = vadd.f32 %v117, %v309
  %v566 = vadd.f32 %v118, %v310
  %v567 = vadd.f32 %v119, %v311
  %v568 = vadd.f32 %v120, %v312
  %v569 = vadd.f32 %v121, %v313
  %v570 = vadd.f32 %v122, %v314
  %v571 = vadd.f32 %v123, %v315
  %v572 = vadd.f32 %v124, %v316
  %v573 = vadd.f32 %v125, %v317
  %v574 = vadd.f32 %v126, %v318
  %v575 = vadd.f32 %v127, %v319
  %v576 = vadd.f32 %v128, %v320
  %v577 = vadd.f32 %v129, %v321
  %v578 = vadd.f32 %v130, %v322
  %v579 = vadd.f32 %v131, %v323
  %v580 = vadd.f32 %v132, %v324
  %v581 = vadd.f32 %v133, %v325
  %v582 = vadd.f32 %v134, %v326
  %v583 = vadd.f32 %v135, %v327
  %v584 = vadd.f32 %v136, %v328
  %v585 = vadd.f32 %v137, %v329
  %v586 = vadd.f32 %v138, %v330
  %v587 = vmul.f32 %v459, 0.5
  %v588 = vmul.f32 %v460, 0.5
  %v589 = vmul.f32 %v461, 0.5
  %v590 = vmul.f32 %v462, 0.5
  %v591 = vmul.f32 %v463, 0.5
  %v592 = vmul.f32 %v464, 0.5
  %v593 = vmul.f32 %v465, 0.5
  %v594 = vmul.f32 %v466, 0.5
  %v595 = vmul.f32 %v467, 0.5
  %v596 = vmul.f32 %v468, 0.5
  %v597 = vmul.f32 %v469, 0.5
  %v598 = vmul.f32 %v470, 0.5
  %v599 = vmul.f32 %v471, 0.5
  %v600 = vmul.f32 %v472, 0.5
  %v601 = vmul.f32 %v473, 0.5
  %v602 = vmul.f32 %v474, 0.5
  %v603 = vmul.f32 %v475, 0.5
  %v604 = vmul.f32 %v476, 0.5
  %v605 = vmul.f32 %v477, 0.5
  %v606 = vmul.f32 %v478, 0.5
  %v607 = vmul.f32 %v479, 0.5
  %v608 = vmul.f32 %v480, 0.5
  %v609 = vmul.f32 %v481, 0.5
  %v610 = vmul.f32 %v482, 0.5
  %v611 = vmul.f32 %v483, 0.5
  %v612 = vmul.f32 %v484, 0.5
  %v613 = vmul.f32 %v485, 0.5
  %v614 = vmul.f32 %v486, 0.5
  %v615 = vmul.f32 %v487, 0.5
  %v616 = vmul.f32 %v488, 0.5
  %v617 = vmul.f32 %v489, 0.5
  %v618 = vmul.f32 %v490, 0.5
  %v619 = vmul.f32 %v491, 0.5
  %v620 = vmul.f32 %v492, 0.5
  %v621 = vmul.f32 %v493, 0.5
  %v622 = vmul.f32 %v494, 0.5
  %v623 = vmul.f32 %v495, 0.5
  %v624 = vmul.f32 %v496, 0.5
  %v625 = vmul.f32 %v497, 0.5
  %v626 = vmul.f32 %v498, 0.5
  %v627 = vmul.f32 %v499, 0.5
  %v628 = vmul.f32 %v500, 0.5
  %v629 = vmul.f32 %v501, 0.5
  %v630 = vmul.f32 %v502, 0.5
  %v631 = vmul.f32 %v503, 0.5
  %v632 = vmul.f32 %v504, 0.5
  %v633 = vmul.f32 %v505, 0.5
  %v634 = vmul.f32 %v506, 0.5
  %v635 = vmul.f32 %v507, 0.5
  %v636 = vmul.f32 %v508, 0.5
  %v637 = vmul.f32 %v509, 0.5
  %v638 = vmul.f32 %v510, 0.5
  %v639 = vmul.f32 %v511, 0.5
  %v640 = vmul.f32 %v512, 0.5
  %v641 = vmul.f32 %v513, 0.5
  %v642 = vmul.f32 %v514, 0.5
  %v643 = vmul.f32 %v515, 0.5
  %v644 = vmul.f32 %v516, 0.5
  %v645 = vmul.f32 %v517, 0.5
  %v646 = vmul.f32 %v518, 0.5
  %v647 = vmul.f32 %v519, 0.5
  %v648 = vmul.f32 %v520, 0.5
  %v649 = vmul.f32 %v521, 0.5
  %v650 = vmul.f32 %v522, 0.5
  %v651 = vmul.f32 %v523, 0.5
  %v652 = vmul.f32 %v524, 0.5
  %v653 = vmul.f32 %v525, 0.5
  %v654 = vmul.f32 %v526, 0.5
  %v655 = vmul.f32 %v527, 0.5
  %v656 = vmul.f32 %v528, 0.5
  %v657 = vmul.f32 %v529, 0.5
  %v658 = vmul.f32 %v530, 0.5
  %v659 = vmul.f32 %v531, 0.5
  %v660 = vmul.f32 %v532, 0.5
  %v661 = vmul.f32 %v533, 0.5
  %v662 = vmul.f32 %v534, 0.5
  %v663 = vmul.f32 %v535, 0.5
  %v664 = vmul.f32 %v536, 0.5
  %v665 = vmul.f32 %v537, 0.5
  %v666 = vmul.f32 %v538, 0.5
  %v667 = vmul.f32 %v539, 0.5
  %v668 = vmul.f32 %v540, 0.5
  %v669 = vmul.f32 %v541, 0.5
  %v670 = vmul.f32 %v542, 0.5
  %v671 = vmul.f32 %v543, 0.5
  %v672 = vmul.f32 %v544, 0.5
  %v673 = vmul.f32 %v545, 0.5
  %v674 = vmul.f32 %v546, 0.5
  %v675 = vmul.f32 %v547, 0.5
  %v676 = vmul.f32 %v548, 0.5
  %v677 = vmul.f32 %v549, 0.5
  %v678 = vmul.f32 %v550, 0.5
  %v679 = vmul.f32 %v551, 0.5
  %v680 = vmul.f32 %v552, 0.5
  %v681 = vmul.f32 %v553, 0.5
  %v682 = vmul.f32 %v554, 0.5
  %v683 = vmul.f32 %v555, 0.5
  %v684 = vmul.f32 %v556, 0.5
  %v685 = vmul.f32 %v557, 0.5
  %v686 = vmul.f32 %v558, 0.5
  %v687 = vmul.f32 %v559, 0.5
  %v688 = vmul.f32 %v560, 0.5
  %v689 = vmul.f32 %v561, 0.5
  %v690 = vmul.f32 %v562, 0.5
  %v691 = vmul.f32 %v563, 0.5
  %v692 = vmul.f32 %v564, 0.5
  %v693 = vmul.f32 %v565, 0.5
  %v694 = vmul.f32 %v566, 0.5
  %v695 = vmul.f32 %v567, 0.5
  %v696 = vmul.f32 %v568, 0.5
  %v697 = vmul.f32 %v569, 0.5
  %v698 = vmul.f32 %v570, 0.5
  %v699 = vmul.f32 %v571, 0.5
  %v700 = vmul.f32 %v572, 0.5
  %v701 = vmul.f32 %v573, 0.5
  %v702 = vmul.f32 %v574, 0.5
  %v703 = vmul.f32 %v575, 0.5
  %v704 = vmul.f32 %v576, 0.5
  %v705 = vmul.f32 %v577, 0.5
  %v706 = vmul.f32 %v578, 0.5
  %v707 = vmul.f32 %v579, 0.5
  %v708 = vmul.f32 %v580, 0.5
  %v709 = vmul.f32 %v581, 0.5
  %v710 = vmul.f32 %v582, 0.5
  %v711 = vmul.f32 %v583, 0.5
  %v712 = vmul.f32 %v584, 0.5
  %v713 = vmul.f32 %v585, 0.5
  %v714 = vmul.f32 %v586, 0.5
  %v715 = vsel %vm331, %v587, %v11
  %v716 = vsel %vm332, %v588, %v12
  %v717 = vsel %vm333, %v589, %v13
  %v718 = vsel %vm334, %v590, %v14
  %v719 = vsel %vm335, %v591, %v15
  %v720 = vsel %vm336, %v592, %v16
  %v721 = vsel %vm337, %v593, %v17
  %v722 = vsel %vm338, %v594, %v18
  %v723 = vsel %vm339, %v595, %v19
  %v724 = vsel %vm340, %v596, %v20
  %v725 = vsel %vm341, %v597, %v21
  %v726 = vsel %vm342, %v598, %v22
  %v727 = vsel %vm343, %v599, %v23
  %v728 = vsel %vm344, %v600, %v24
  %v729 = vsel %vm345, %v601, %v25
  %v730 = vsel %vm346, %v602, %v26
  %v731 = vsel %vm347, %v603, %v27
  %v732 = vsel %vm348, %v604, %v28
  %v733 = vsel %vm349, %v605, %v29
  %v734 = vsel %vm350, %v606, %v30
  %v735 = vsel %vm351, %v607, %v31
  %v736 = vsel %vm352, %v608, %v32
  %v737 = vsel %vm353, %v609, %v33
  %v738 = vsel %vm354, %v610, %v34
  %v739 = vsel %vm355, %v611, %v35
  %v740 = vsel %vm356, %v612, %v36
  %v741 = vsel %vm357, %v613, %v37
  %v742 = vsel %vm358, %v614, %v38
  %v743 = vsel %vm359, %v615, %v39
  %v744 = vsel %vm360, %v616, %v40
  %v745 = vsel %vm361, %v617, %v41
  %v746 = vsel %vm362, %v618, %v42
  %v747 = vsel %vm363, %v619, %v43
  %v748 = vsel %vm364, %v620, %v44
  %v749 = vsel %vm365, %v621, %v45
  %v750 = vsel %vm366, %v622, %v46
  %v751 = vsel %vm367, %v623, %v47
  %v752 = vsel %vm368, %v624, %v48
  %v753 = vsel %vm369, %v625, %v49
  %v754 = vsel %vm370, %v626, %v50
  %v755 = vsel %vm371, %v627, %v51
  %v756 = vsel %vm372, %v628, %v52
  %v757 = vsel %vm373, %v629, %v53
  %v758 = vsel %vm374, %v630, %v54
  %v759 = vsel %vm375, %v631, %v55
  %v760 = vsel %vm376, %v632, %v56
  %v761 = vsel %vm377, %v633, %v57
  %v762 = vsel %vm378, %v634, %v58
  %v763 = vsel %vm379, %v635, %v59
  %v764 = vsel %vm380, %v636, %v60
  %v765 = vsel %vm381, %v637, %v61
  %v766 = vsel %vm382, %v638, %v62
  %v767 = vsel %vm383, %v639, %v63
  %v768 = vsel %vm384, %v640, %v64
  %v769 = vsel %vm385, %v641, %v65
  %v770 = vsel %vm386, %v642, %v66
  %v771 = vsel %vm387, %v643, %v67
  %v772 = vsel %vm388, %v644, %v68
  %v773 = vsel %vm389, %v645, %v69
  %v774 = vsel %vm390, %v646, %v70
  %v775 = vsel %vm391, %v647, %v71
  %v776 = vsel %vm392, %v648, %v72
  %v777 = vsel %vm393, %v649, %v73
  %v778 = vsel %vm394, %v650, %v74
  %v779 = vsel %vm395, %v651, %v75
  %v780 = vsel %vm396, %v652, %v76
  %v781 = vsel %vm397, %v653, %v77
  %v782 = vsel %vm398, %v654, %v78
  %v783 = vsel %vm399, %v655, %v79
  %v784 = vsel %vm400, %v656, %v80
  %v785 = vsel %vm401, %v657, %v81
  %v786 = vsel %vm402, %v658, %v82
  %v787 = vsel %vm403, %v659, %v83
  %v788 = vsel %vm404, %v660, %v84
  %v789 = vsel %vm405, %v661, %v85
  %v790 = vsel %vm406, %v662, %v86
  %v791 = vsel %vm407, %v663, %v87
  %v792 = vsel %vm408, %v664, %v88
  %v793 = vsel %vm409, %v665, %v89
  %v794 = vsel %vm410, %v666, %v90
  %v795 = vsel %vm411, %v667, %v91
  %v796 = vsel %vm412, %v668, %v92
  %v797 = vsel %vm413, %v669, %v93
  %v798 = vsel %vm414, %v670, %v94
  %v799 = vsel %vm415, %v671, %v95
  %v800 = vsel %vm416, %v672, %v96
  %v801 = vsel %vm417, %v673, %v97
  %v802 = vsel %vm418, %v674, %v98
  %v803 = vsel %vm419, %v675, %v99
  %v804 = vsel %vm420, %v676, %v100
  %v805 = vsel %vm421, %v677, %v101
  %v806 = vsel %vm422, %v678, %v102
  %v807 = vsel %vm423, %v679, %v103
  %v808 = vsel %vm424, %v680, %v104
  %v809 = vsel %vm425, %v681, %v105
  %v810 = vsel %vm426, %v682, %v106
  %v811 = vsel %vm427, %v683, %v107
  %v812 = vsel %vm428, %v684, %v108
  %v813 = vsel %vm429, %v685, %v109
  %v814 = vsel %vm430, %v686, %v110
  %v815 = vsel %vm431, %v687, %v111
  %v816 = vsel %vm432, %v688, %v112
  %v817 = vsel %vm433, %v689, %v113
  %v818 = vsel %vm434, %v690, %v114
  %v819 = vsel %vm435, %v691, %v115
  %v820 = vsel %vm436, %v692, %v116
  %v821 = vsel %vm437, %v693, %v117
  %v822 = vsel %vm438, %v694, %v118
  %v823 = vsel %vm439, %v695, %v119
  %v824 = vsel %vm440, %v696, %v120
  %v825 = vsel %vm441, %v697, %v121
  %v826 = vsel %vm442, %v698, %v122
  %v827 = vsel %vm443, %v699, %v123
  %v828 = vsel %vm444, %v700, %v124
  %v829 = vsel %vm445, %v701, %v125
  %v830 = vsel %vm446, %v702, %v126
  %v831 = vsel %vm447, %v703, %v127
  %v832 = vsel %vm448, %v704, %v128
  %v833 = vsel %vm449, %v705, %v129
  %v834 = vsel %vm450, %v706, %v130
  %v835 = vsel %vm451, %v707, %v131
  %v836 = vsel %vm452, %v708, %v132
  %v837 = vsel %vm453, %v709, %v133
  %v838 = vsel %vm454, %v710, %v134
  %v839 = vsel %vm455, %v711, %v135
  %v840 = vsel %vm456, %v712, %v136
  %v841 = vsel %vm457, %v713, %v137
  %v842 = vsel %vm458, %v714, %v138
  %843 = vst [vmem:[%s2] sm:$0xff] %v715
  %844 = vst [vmem:[%s2 + $0x8] sm:$0xff] %v716
  %845 = vst [vmem:[%s2 + $0x10] sm:$0xff] %v717
  %vm846 = vcmask 130048
  %847 = vst.msk [vmem:[%s2 + $0x18] sm:$0xff] %vm846, %v718
  %848 = vst [vmem:[%s2 + $0x20] sm:$0xff] %v719
  %849 = vst [vmem:[%s2 + $0x28] sm:$0xff] %v720
  %850 = vst [vmem:[%s2 + $0x30] sm:$0xff] %v721
  %851 = vst.msk [vmem:[%s2 + $0x38] sm:$0xff] %vm846, %v722
  %852 = vst [vmem:[%s2 + $0x40] sm:$0xff] %v723
  %853 = vst [vmem:[%s2 + $0x48] sm:$0xff] %v724
  %854 = vst [vmem:[%s2 + $0x50] sm:$0xff] %v725
  %855 = vst.msk [vmem:[%s2 + $0x58] sm:$0xff] %vm846, %v726
  %856 = vst [vmem:[%s2 + $0x60] sm:$0xff] %v727
  %857 = vst [vmem:[%s2 + $0x68] sm:$0xff] %v728
  %858 = vst [vmem:[%s2 + $0x70] sm:$0xff] %v729
  %859 = vst.msk [vmem:[%s2 + $0x78] sm:$0xff] %vm846, %v730
  %860 = vst [vmem:[%s2 + $0x80] sm:$0xff] %v731
  %861 = vst [vmem:[%s2 + $0x88] sm:$0xff] %v732
  %862 = vst [vmem:[%s2 + $0x90] sm:$0xff] %v733
  %863 = vst.msk [vmem:[%s2 + $0x98] sm:$0xff] %vm846, %v734
  %864 = vst [vmem:[%s2 + $0xa0] sm:$0xff] %v735
  %865 = vst [vmem:[%s2 + $0xa8] sm:$0xff] %v736
  %866 = vst [vmem:[%s2 + $0xb0] sm:$0xff] %v737
  %867 = vst.msk [vmem:[%s2 + $0xb8] sm:$0xff] %vm846, %v738
  %868 = vst [vmem:[%s2 + $0xc0] sm:$0xff] %v739
  %869 = vst [vmem:[%s2 + $0xc8] sm:$0xff] %v740
  %870 = vst [vmem:[%s2 + $0xd0] sm:$0xff] %v741
  %871 = vst.msk [vmem:[%s2 + $0xd8] sm:$0xff] %vm846, %v742
  %872 = vst [vmem:[%s2 + $0xe0] sm:$0xff] %v743
  %873 = vst [vmem:[%s2 + $0xe8] sm:$0xff] %v744
  %874 = vst [vmem:[%s2 + $0xf0] sm:$0xff] %v745
  %875 = vst.msk [vmem:[%s2 + $0xf8] sm:$0xff] %vm846, %v746
  %876 = vst [vmem:[%s2 + $0x100] sm:$0xff] %v747
  %877 = vst [vmem:[%s2 + $0x108] sm:$0xff] %v748
  %878 = vst [vmem:[%s2 + $0x110] sm:$0xff] %v749
  %879 = vst.msk [vmem:[%s2 + $0x118] sm:$0xff] %vm846, %v750
  %880 = vst [vmem:[%s2 + $0x120] sm:$0xff] %v751
  %881 = vst [vmem:[%s2 + $0x128] sm:$0xff] %v752
  %882 = vst [vmem:[%s2 + $0x130] sm:$0xff] %v753
  %883 = vst.msk [vmem:[%s2 + $0x138] sm:$0xff] %vm846, %v754
  %884 = vst [vmem:[%s2 + $0x140] sm:$0xff] %v755
  %885 = vst [vmem:[%s2 + $0x148] sm:$0xff] %v756
  %886 = vst [vmem:[%s2 + $0x150] sm:$0xff] %v757
  %887 = vst.msk [vmem:[%s2 + $0x158] sm:$0xff] %vm846, %v758
  %888 = vst [vmem:[%s2 + $0x160] sm:$0xff] %v759
  %889 = vst [vmem:[%s2 + $0x168] sm:$0xff] %v760
  %890 = vst [vmem:[%s2 + $0x170] sm:$0xff] %v761
  %891 = vst.msk [vmem:[%s2 + $0x178] sm:$0xff] %vm846, %v762
  %892 = vst [vmem:[%s2 + $0x180] sm:$0xff] %v763
  %893 = vst [vmem:[%s2 + $0x188] sm:$0xff] %v764
  %894 = vst [vmem:[%s2 + $0x190] sm:$0xff] %v765
  %895 = vst.msk [vmem:[%s2 + $0x198] sm:$0xff] %vm846, %v766
  %896 = vst [vmem:[%s2 + $0x1a0] sm:$0xff] %v767
  %897 = vst [vmem:[%s2 + $0x1a8] sm:$0xff] %v768
  %898 = vst [vmem:[%s2 + $0x1b0] sm:$0xff] %v769
  %899 = vst.msk [vmem:[%s2 + $0x1b8] sm:$0xff] %vm846, %v770
  %900 = vst [vmem:[%s2 + $0x1c0] sm:$0xff] %v771
  %901 = vst [vmem:[%s2 + $0x1c8] sm:$0xff] %v772
  %902 = vst [vmem:[%s2 + $0x1d0] sm:$0xff] %v773
  %903 = vst.msk [vmem:[%s2 + $0x1d8] sm:$0xff] %vm846, %v774
  %904 = vst [vmem:[%s2 + $0x1e0] sm:$0xff] %v775
  %905 = vst [vmem:[%s2 + $0x1e8] sm:$0xff] %v776
  %906 = vst [vmem:[%s2 + $0x1f0] sm:$0xff] %v777
  %907 = vst.msk [vmem:[%s2 + $0x1f8] sm:$0xff] %vm846, %v778
  %908 = vst [vmem:[%s2 + $0x200] sm:$0xff] %v779
  %909 = vst [vmem:[%s2 + $0x208] sm:$0xff] %v780
  %910 = vst [vmem:[%s2 + $0x210] sm:$0xff] %v781
  %911 = vst.msk [vmem:[%s2 + $0x218] sm:$0xff] %vm846, %v782
  %912 = vst [vmem:[%s2 + $0x220] sm:$0xff] %v783
  %913 = vst [vmem:[%s2 + $0x228] sm:$0xff] %v784
  %914 = vst [vmem:[%s2 + $0x230] sm:$0xff] %v785
  %915 = vst.msk [vmem:[%s2 + $0x238] sm:$0xff] %vm846, %v786
  %916 = vst [vmem:[%s2 + $0x240] sm:$0xff] %v787
  %917 = vst [vmem:[%s2 + $0x248] sm:$0xff] %v788
  %918 = vst [vmem:[%s2 + $0x250] sm:$0xff] %v789
  %919 = vst.msk [vmem:[%s2 + $0x258] sm:$0xff] %vm846, %v790
  %920 = vst [vmem:[%s2 + $0x260] sm:$0xff] %v791
  %921 = vst [vmem:[%s2 + $0x268] sm:$0xff] %v792
  %922 = vst [vmem:[%s2 + $0x270] sm:$0xff] %v793
  %923 = vst.msk [vmem:[%s2 + $0x278] sm:$0xff] %vm846, %v794
  %924 = vst [vmem:[%s2 + $0x280] sm:$0xff] %v795
  %925 = vst [vmem:[%s2 + $0x288] sm:$0xff] %v796
  %926 = vst [vmem:[%s2 + $0x290] sm:$0xff] %v797
  %927 = vst.msk [vmem:[%s2 + $0x298] sm:$0xff] %vm846, %v798
  %928 = vst [vmem:[%s2 + $0x2a0] sm:$0xff] %v799
  %929 = vst [vmem:[%s2 + $0x2a8] sm:$0xff] %v800
  %930 = vst [vmem:[%s2 + $0x2b0] sm:$0xff] %v801
  %931 = vst.msk [vmem:[%s2 + $0x2b8] sm:$0xff] %vm846, %v802
  %932 = vst [vmem:[%s2 + $0x2c0] sm:$0xff] %v803
  %933 = vst [vmem:[%s2 + $0x2c8] sm:$0xff] %v804
  %934 = vst [vmem:[%s2 + $0x2d0] sm:$0xff] %v805
  %935 = vst.msk [vmem:[%s2 + $0x2d8] sm:$0xff] %vm846, %v806
  %936 = vst [vmem:[%s2 + $0x2e0] sm:$0xff] %v807
  %937 = vst [vmem:[%s2 + $0x2e8] sm:$0xff] %v808
  %938 = vst [vmem:[%s2 + $0x2f0] sm:$0xff] %v809
  %939 = vst.msk [vmem:[%s2 + $0x2f8] sm:$0xff] %vm846, %v810
  %940 = vst [vmem:[%s2 + $0x300] sm:$0xff] %v811
  %941 = vst [vmem:[%s2 + $0x308] sm:$0xff] %v812
  %942 = vst [vmem:[%s2 + $0x310] sm:$0xff] %v813
  %943 = vst.msk [vmem:[%s2 + $0x318] sm:$0xff] %vm846, %v814
  %944 = vst [vmem:[%s2 + $0x320] sm:$0xff] %v815
  %945 = vst [vmem:[%s2 + $0x328] sm:$0xff] %v816
  %946 = vst [vmem:[%s2 + $0x330] sm:$0xff] %v817
  %947 = vst.msk [vmem:[%s2 + $0x338] sm:$0xff] %vm846, %v818
  %948 = vst [vmem:[%s2 + $0x340] sm:$0xff] %v819
  %949 = vst [vmem:[%s2 + $0x348] sm:$0xff] %v820
  %950 = vst [vmem:[%s2 + $0x350] sm:$0xff] %v821
  %951 = vst.msk [vmem:[%s2 + $0x358] sm:$0xff] %vm846, %v822
  %952 = vst [vmem:[%s2 + $0x360] sm:$0xff] %v823
  %953 = vst [vmem:[%s2 + $0x368] sm:$0xff] %v824
  %954 = vst [vmem:[%s2 + $0x370] sm:$0xff] %v825
  %955 = vst.msk [vmem:[%s2 + $0x378] sm:$0xff] %vm846, %v826
  %956 = vst [vmem:[%s2 + $0x380] sm:$0xff] %v827
  %957 = vst [vmem:[%s2 + $0x388] sm:$0xff] %v828
  %958 = vst [vmem:[%s2 + $0x390] sm:$0xff] %v829
  %959 = vst.msk [vmem:[%s2 + $0x398] sm:$0xff] %vm846, %v830
  %960 = vst [vmem:[%s2 + $0x3a0] sm:$0xff] %v831
  %961 = vst [vmem:[%s2 + $0x3a8] sm:$0xff] %v832
  %962 = vst [vmem:[%s2 + $0x3b0] sm:$0xff] %v833
  %963 = vst.msk [vmem:[%s2 + $0x3b8] sm:$0xff] %vm846, %v834
  %964 = vst [vmem:[%s2 + $0x3c0] sm:$0xff] %v835
  %965 = vst [vmem:[%s2 + $0x3c8] sm:$0xff] %v836
  %966 = vst [vmem:[%s2 + $0x3d0] sm:$0xff] %v837
  %967 = vst.msk [vmem:[%s2 + $0x3d8] sm:$0xff] %vm846, %v838
  %968 = vst [vmem:[%s2 + $0x3e0] sm:$0xff] %v839
  %969 = vst [vmem:[%s2 + $0x3e8] sm:$0xff] %v840
  %970 = vst [vmem:[%s2 + $0x3f0] sm:$0xff] %v841
  %971 = vst.msk [vmem:[%s2 + $0x3f8] sm:$0xff] %vm846, %v842
  // Predicated region
  $region10: #{ablated_pair_energies_forward.3} parent=0 // pred_check
    _
  $region11: #{ablated_pair_energies_forward.3} parent=0 // pred_check_branch
    %973 = sbr.rel (0) target = $region13
  $region12: #{ablated_pair_energies_forward.3} parent=0 // pred_region
    _
  $region13: #{ablated_pair_energies_forward.3} parent=0 // pred_fallthru
    _
  // Predicated region
  $region14: #{ablated_pair_energies_forward.3} parent=0 // pred_check
    _
  $region15: #{ablated_pair_energies_forward.3} parent=0 // pred_check_branch
    %975 = sbr.rel (0) target = $region17
  $region16: #{ablated_pair_energies_forward.3} parent=0 // pred_region
    _
  $region17: #{ablated_pair_energies_forward.3} parent=0 // pred_fallthru
    _

</llo_original>
